<compile_context>
chip_gen: v7x
topology: tpu7x:2x2x1
jax: 0.10.0
libtpu: 0.0.40
codegen_flags: <defaults>
</compile_context>

<pallas_src>
import math

import jax
import jax.numpy as jnp
from jax.experimental import pallas as pl
from jax.experimental.pallas import tpu as pltpu


def _model3_kernel(theta_y_ref, theta_z_ref, x_ref, y_ref, z_ref):
    ty = theta_y_ref[0]          # scalars live in SMEM
    tz = theta_z_ref[0]
    x = x_ref[...]               # (TB, C) lane-dense tile, C = G*N

    # ZNet: z = 2 * theta_z * x  (pure elementwise, full-width stores).
    z_ref[...] = ((2.0 * tz) * x).astype(z_ref.dtype)

    # YNet: per-original-row sum of squares.  In the regrouped layout each
    # kernel row holds G original rows of length N, so the row sums are a
    # segment sum = (x*x) @ block_diag_of_ones(C, G) on the MXU.
    G = y_ref.shape[-1]
    C = x_ref.shape[-1]
    N = C // G
    x32 = x.astype(jnp.float32)
    xx = x32 * x32
    if G == 1:
        y = jnp.sum(xx, axis=-1, keepdims=True)
    else:
        # Block-diagonal ones built in-kernel (static shapes; VPU iota+cmp,
        # no integer division so it lowers cleanly for any N).
        row = jax.lax.broadcasted_iota(jnp.int32, (C, G), 0)
        col = jax.lax.broadcasted_iota(jnp.int32, (C, G), 1)
        start = col * N
        seg = jnp.logical_and(row >= start, row < start + N).astype(jnp.float32)
        y = jnp.dot(xx, seg, preferred_element_type=jnp.float32)
    y_ref[...] = (ty * y).astype(y_ref.dtype)


def _choose_group(N, B, packing):
    """Pick regrouping factor G so C = G*N is a multiple of 128 (lane-dense z),
    widened to a multiple of 128 (lane-dense y) when B allows, while keeping
    the in-kernel (C, G) segment matrix small."""
    seg_cap = 1 << 20  # bytes; keeps kernel-internal VMEM use modest

    def seg_bytes(g):
        return (g * N) * g * 4

    if N % 128 == 0:
        g0 = 1
    else:
        g0 = 128 // math.gcd(N, 128)
        if seg_bytes(g0) > seg_cap:
            # N is large & odd-ish: stores are already nearly lane-dense.
            return 1

    g = g0
    g_wide = g0 * 128 // math.gcd(g0, 128)   # lcm(g0, 128)
    if (g_wide != g0 and B % g_wide == 0 and B // g_wide >= packing
            and seg_bytes(g_wide) <= seg_cap):
        g = g_wide                           # y stores become lane-dense too
    return g


def model3_forward(t, x, theta_y, theta_z, *, block_rows=None,
                   vmem_budget_bytes=10 * 1024 * 1024):
    """t: (..., 1) (unused by the math, matching the PyTorch module),
       x: (..., N).  Returns (y: (..., 1), z: (..., N))."""
    del t  # forward() never reads t

    orig_shape = x.shape
    N = orig_shape[-1]
    B = math.prod(orig_shape[:-1])
    itemsize = jnp.dtype(x.dtype).itemsize
    packing = max(8, 32 // itemsize)     # sublane packing: f32->8, bf16->16, int8->32

    xf = x.reshape(B, N)

    # ---- lane-dense regrouping: (B, N) -> (M, C) with C = G*N ----
    G = _choose_group(N, B, packing)
    B_pad = ((B + G - 1) // G) * G
    if B_pad != B:
        # Zero-pad instead of reverting to a lane-sparse layout; padded rows
        # produce y=0 / z=0 and are sliced off below.
        xf = jnp.pad(xf, ((0, B_pad - B), (0, 0)))
    M = B_pad // G
    C = G * N
    x2 = xf.reshape(M, C)

    # ---- row-tile size from a VMEM byte budget ----
    # Double-buffered working set per kernel row: 2*(x + z + y).
    row_bytes = 2 * (2 * C + G) * itemsize
    tb = max(vmem_budget_bytes // row_bytes, 1)
    if block_rows is not None:
        tb = min(tb, block_rows)
    if M <= packing:
        tb = M                               # whole (small) array: always legal
    else:
        tb = min(tb, M)
        tb -= tb % packing
        tb = max(tb, packing)
        # Keep >= 4 grid steps when the problem is large enough, so the
        # "parallel" axis splits across both v7x TensorCores and each core's
        # auto-pipeline still has prefetch/writeback overlap.
        min_steps = 4
        if M >= min_steps * packing:
            cap = (M // min_steps) - ((M // min_steps) % packing)
            tb = min(tb, max(cap, packing))
    grid = (pl.cdiv(M, tb),)

    cost = pl.CostEstimate(
        flops=3 * M * C,                                  # square, segsum, scale
        transcendentals=0,
        bytes_accessed=(2 * M * C + M * G) * itemsize,    # read x, write z, write y
    )

    ty = jnp.asarray(theta_y, jnp.float32).reshape(1)
    tz = jnp.asarray(theta_z, jnp.float32).reshape(1)

    y2, z2 = pl.pallas_call(
        _model3_kernel,
        out_shape=(
            jax.ShapeDtypeStruct((M, G), x.dtype),   # y, regrouped
            jax.ShapeDtypeStruct((M, C), x.dtype),   # z, regrouped
        ),
        grid=grid,
        in_specs=[
            pl.BlockSpec(memory_space=pltpu.MemorySpace.SMEM),   # theta_y
            pl.BlockSpec(memory_space=pltpu.MemorySpace.SMEM),   # theta_z
            pl.BlockSpec((tb, C), lambda i: (i, 0)),             # x tile
        ],
        out_specs=(
            pl.BlockSpec((tb, G), lambda i: (i, 0)),             # y tile
            pl.BlockSpec((tb, C), lambda i: (i, 0)),             # z tile
        ),
        compiler_params=pltpu.CompilerParams(
            dimension_semantics=("parallel",),                   # megacore on v7x
        ),
        cost_estimate=cost,
    )(ty, tz, x2)

    y = y2.reshape(B_pad, 1)[:B].reshape(orig_shape[:-1] + (1,))
    z = z2.reshape(B_pad, N)[:B].reshape(orig_shape)
    return y, z


if __name__ == "__main__":
    key = jax.random.PRNGKey(0)
    kx, kt = jax.random.split(key)

    # (..., n) inputs with n=16 -> B = 8*128 = 1024 flattened rows.
    shape = (8, 128, 16)
    x = jax.random.normal(kx, shape, dtype=jnp.float32)
    t = jax.random.uniform(kt, shape[:-1] + (1,), dtype=jnp.float32)

    # Matches torch.nn.Parameter(torch.tensor([-1.0])) for both sub-nets.
    theta_y = jnp.array([-1.0], dtype=jnp.float32)
    theta_z = jnp.array([-1.0], dtype=jnp.float32)

    y, z = model3_forward(t, x, theta_y, theta_z)
    jax.block_until_ready((y, z))

    # Reference check against plain JAX semantics.
    y_ref = theta_y * jnp.sum(x * x, axis=-1, keepdims=True)
    z_ref = 2.0 * theta_z * x
    assert y.shape == shape[:-1] + (1,) and z.shape == shape
    assert jnp.allclose(y, y_ref, rtol=1e-6, atol=1e-5)
    assert jnp.allclose(z, z_ref, rtol=1e-6, atol=1e-6)

    print("KERNEL_OK")
</pallas_src>

<mosaic_0001>
module attributes {stable_mosaic.version = 11 : i64} {
  func.func @_model3_kernel(%arg0: i32, %arg1: memref<1xf32, #tpu.memory_space<smem>>, %arg2: memref<1xf32, #tpu.memory_space<smem>>, %arg3: memref<8x2048xf32, #tpu.memory_space<vmem>>, %arg4: memref<8x128xf32, #tpu.memory_space<vmem>>, %arg5: memref<8x2048xf32, #tpu.memory_space<vmem>>) attributes {dimension_semantics = [#tpu.dimension_semantics<parallel>], iteration_bounds = array<i64: 1>, scalar_prefetch = 0 : i64, scratch_operands = 0 : i64, tpu.core_type = #tpu.core_type<tc>, window_params = [{transform_indices = @transform_0, window_bounds = array<i64: 1>}, {transform_indices = @transform_1, window_bounds = array<i64: 1>}, {transform_indices = @transform_2, window_bounds = array<i64: 8, 2048>}, {transform_indices = @transform_3, window_bounds = array<i64: 8, 128>}, {transform_indices = @transform_4, window_bounds = array<i64: 8, 2048>}]} {
    %c0 = arith.constant 0 : index
    %0 = memref.load %arg1[%c0] : memref<1xf32, #tpu.memory_space<smem>>
    %c0_0 = arith.constant 0 : index
    %1 = memref.load %arg2[%c0_0] : memref<1xf32, #tpu.memory_space<smem>>
    %c0_1 = arith.constant 0 : index
    %c0_2 = arith.constant 0 : index
    %2 = vector.load %arg3[%c0_1, %c0_2] : memref<8x2048xf32, #tpu.memory_space<vmem>>, vector<8x2048xf32>
    %cst = arith.constant 2.000000e+00 : f32
    %3 = arith.mulf %cst, %1 : f32
    %4 = vector.broadcast %3 : f32 to vector<8x2048xf32>
    %5 = arith.mulf %4, %2 : vector<8x2048xf32>
    %c0_3 = arith.constant 0 : index
    %c0_4 = arith.constant 0 : index
    %6 = vector.load %arg5[%c0_3, %c0_4] : memref<8x2048xf32, #tpu.memory_space<vmem>>, vector<8x2048xf32>
    tpu.vector_store %arg5[%c0_3, %c0_4], %5 {strides = array<i32>} : memref<8x2048xf32, #tpu.memory_space<vmem>>, vector<8x2048xf32>,
    %7 = arith.mulf %2, %2 : vector<8x2048xf32>
    %8 = tpu.iota {dimensions = array<i32: 0>} : vector<2048x128xi32>
    %9 = tpu.iota {dimensions = array<i32: 1>} : vector<2048x128xi32>
    %c16_i32 = arith.constant 16 : i32
    %10 = vector.broadcast %c16_i32 : i32 to vector<2048x128xi32>
    %11 = arith.muli %9, %10 : vector<2048x128xi32>
    %12 = arith.cmpi sge, %8, %11 : vector<2048x128xi32>
    %c16_i32_5 = arith.constant 16 : i32
    %13 = vector.broadcast %c16_i32_5 : i32 to vector<2048x128xi32>
    %14 = arith.addi %11, %13 : vector<2048x128xi32>
    %15 = arith.cmpi slt, %8, %14 : vector<2048x128xi32>
    %16 = arith.andi %12, %15 : vector<2048x128xi1>
    %17 = arith.extui %16 : vector<2048x128xi1> to vector<2048x128xi32>
    %18 = arith.sitofp %17 : vector<2048x128xi32> to vector<2048x128xf32>
    %cst_6 = arith.constant dense<0.000000e+00> : vector<8x128xf32>
    %19 = tpu.matmul %7, %18, %cst_6 {dimension_numbers = #tpu.dot_dimension_numbers<[1], [0], [0], [1], [0, 0, 1, 1], [], []>} : vector<8x2048xf32>, vector<2048x128xf32>, vector<8x128xf32> -> vector<8x128xf32>
    %20 = vector.broadcast %0 : f32 to vector<8x128xf32>
    %21 = arith.mulf %20, %19 : vector<8x128xf32>
    %c0_7 = arith.constant 0 : index
    %c0_8 = arith.constant 0 : index
    %22 = vector.load %arg4[%c0_7, %c0_8] : memref<8x128xf32, #tpu.memory_space<vmem>>, vector<8x128xf32>
    tpu.vector_store %arg4[%c0_7, %c0_8], %21 {strides = array<i32>} : memref<8x128xf32, #tpu.memory_space<vmem>>, vector<8x128xf32>,
    return
  }
  func.func @transform_0(%arg0: i32) -> i32 {
    %c0_i32 = arith.constant 0 : i32
    %c0_i32_0 = arith.constant 0 : i32
    return %c0_i32 : i32
  }
  func.func @transform_1(%arg0: i32) -> i32 {
    %c0_i32 = arith.constant 0 : i32
    %c0_i32_0 = arith.constant 0 : i32
    return %c0_i32 : i32
  }
  func.func @transform_2(%arg0: i32) -> (i32, i32) {
    %c0_i32 = arith.constant 0 : i32
    %c0_i32_0 = arith.constant 0 : i32
    return %arg0, %c0_i32 : i32, i32
  }
  func.func @transform_3(%arg0: i32) -> (i32, i32) {
    %c0_i32 = arith.constant 0 : i32
    %c0_i32_0 = arith.constant 0 : i32
    return %arg0, %c0_i32 : i32, i32
  }
  func.func @transform_4(%arg0: i32) -> (i32, i32) {
    %c0_i32 = arith.constant 0 : i32
    %c0_i32_0 = arith.constant 0 : i32
    return %arg0, %c0_i32 : i32, i32
  }
}

</mosaic_0001>

<llo_original>
// kernel: tpu_custom_call.1
$region0: #{tpu_custom_call.1}
  #allocation0 [shape = 'u32[]', space=smem, size = 0x4, offset = 0x4, fixed_abs, tag = 'smem constant byte address 0x4 - core index']
  #allocation1 [shape = 'u32[144,128]{1,0:T(1,128)}', space=vmem, size = 0x12000, scoped, tag = 'internal scratch']
  #allocation2 [shape = 'f32[1]{0:T(128)S(6)}', space=smem, size = 0x200, scoped, tag = 'scoped memory for tpu_custom_call.1']
  #allocation3 [shape = 'f32[1]{0:T(128)S(6)}', space=smem, size = 0x200, scoped, tag = 'scoped memory for tpu_custom_call.1']
  %s0 = inlined_call_operand.<no memory space> [shape: f32[1], index: 0, kind: input, shape index: {}]
  %s1 = inlined_call_operand.<no memory space> [shape: f32[1], index: 1, kind: input, shape index: {}]
  %s2 = inlined_call_operand.hbm [shape: f32[8,2048], index: 2, kind: input, shape index: {}]
  %s3 = inlined_call_operand.hbm [shape: f32[8,128], index: 3, kind: output, shape index: {0}]
  %s4 = inlined_call_operand.hbm [shape: f32[8,2048], index: 4, kind: output, shape index: {1}]
  %5 = xla_tuple %s3, %s4
  %s6 = sld [smem:[#allocation0]]
  $region34: #{tpu_custom_call.1} parent=0
    _
  %s8 = ssub.s32 1, %s6
  %s9 = scalar_select 0, %s8, %s6
  %10 = sst [smem:[#allocation2]] %s0
  %11 = sst [smem:[#allocation3]] %s1
  $region1: #{tpu_custom_call.1} parent=0
    #allocation4 [shape = 'u8[65536]{0}', space=vmem, size = 0x10000, scoped, tag = 'input window, operand 2, single buffered']
    #allocation5 [shape = 's32[1]{0}', space=sflag, size = 0x4, scoped, tag = 'scoped memory for tpu_custom_call.1']
    #allocation6 [shape = 's32[1]{0}', space=sflag, size = 0x4, scoped, tag = 'scoped memory for tpu_custom_call.1']
    #allocation7 [shape = 'u8[4096]{0}', space=vmem, size = 0x1000, scoped, tag = 'output window, operand 0, single buffered']
    #allocation8 [shape = 'u8[65536]{0}', space=vmem, size = 0x10000, scoped, tag = 'output window, operand 1, single buffered']
    #allocation9 [shape = 's32[1]{0}', space=sflag, size = 0x4, scoped, tag = 'scoped memory for tpu_custom_call.1']
    %12 = vsyncpa [#allocation5], 0
    %13 = vsyncpa [#allocation6], 0
    %14 = vsyncpa [#allocation9], 0
    // Predicated region
    $region2: #{tpu_custom_call.1} parent=1 // pred_check
      _
    $region3: #{tpu_custom_call.1} parent=1 // pred_check_branch
      %16 = sbr.rel (0) target = $region5
    $region4: #{tpu_custom_call.1} parent=1 // pred_region
      _
    $region5: #{tpu_custom_call.1} parent=1 // pred_fallthru
      _
    // Predicated region
    $region6: #{tpu_custom_call.1} parent=1 // pred_check
      _
    $region7: #{tpu_custom_call.1} parent=1 // pred_check_branch
      %18 = sbr.rel (0) target = $region9
    $region8: #{tpu_custom_call.1} parent=1 // pred_region
      _
    $region9: #{tpu_custom_call.1} parent=1 // pred_fallthru
      _
    // Predicated region
    $region10: #{tpu_custom_call.1} parent=1 // pred_check
      _
    $region11: #{tpu_custom_call.1} parent=1 // pred_check_branch
      %20 = sbr.rel (0) target = $region13
    $region12: #{tpu_custom_call.1} parent=1 // pred_region
      %s22 = ssub.s32 2048, 2048
      %23 = vsyncadd [#allocation5], %s22
      %s25 = sshll.u32 [#allocation4], 4
      %s26 = int_to_ptr.vmem [resolvable:$true] %s25
      %28 = dma.hbm_to_vmem [thread:$0]  %s2, 2048, %s26, [#allocation5]
    $region13: #{tpu_custom_call.1} parent=1 // pred_fallthru
      _
    // Predicated region
    $region14: #{tpu_custom_call.1} parent=1 // pred_check
      _
    $region15: #{tpu_custom_call.1} parent=1 // pred_check_branch
      %30 = sbr.rel (0) target = $region17
    $region16: #{tpu_custom_call.1} parent=1 // pred_region
      %31 = dma.done [#allocation5], 2048
    $region17: #{tpu_custom_call.1} parent=1 // pred_fallthru
      _
    %s32 = sld [smem:[#allocation2]]
    %s33 = sld [smem:[#allocation3]]
    %v34 = vld [vmem:[#allocation4] sm:$0xff]
    %v35 = vld [vmem:[#allocation4 + $0x8] sm:$0xff]
    %v36 = vld [vmem:[#allocation4 + $0x10] sm:$0xff]
    %v37 = vld [vmem:[#allocation4 + $0x18] sm:$0xff]
    %v38 = vld [vmem:[#allocation4 + $0x20] sm:$0xff]
    %v39 = vld [vmem:[#allocation4 + $0x28] sm:$0xff]
    %v40 = vld [vmem:[#allocation4 + $0x30] sm:$0xff]
    %v41 = vld [vmem:[#allocation4 + $0x38] sm:$0xff]
    %v42 = vld [vmem:[#allocation4 + $0x40] sm:$0xff]
    %v43 = vld [vmem:[#allocation4 + $0x48] sm:$0xff]
    %v44 = vld [vmem:[#allocation4 + $0x50] sm:$0xff]
    %v45 = vld [vmem:[#allocation4 + $0x58] sm:$0xff]
    %v46 = vld [vmem:[#allocation4 + $0x60] sm:$0xff]
    %v47 = vld [vmem:[#allocation4 + $0x68] sm:$0xff]
    %v48 = vld [vmem:[#allocation4 + $0x70] sm:$0xff]
    %v49 = vld [vmem:[#allocation4 + $0x78] sm:$0xff]
    %s50 = smul.f32 %s33, 2.0
    %v51 = vstv %s50
    %v52 = vmul.f32 %v51, %v34
    %v53 = vmul.f32 %v51, %v35
    %v54 = vmul.f32 %v51, %v36
    %v55 = vmul.f32 %v51, %v37
    %v56 = vmul.f32 %v51, %v38
    %v57 = vmul.f32 %v51, %v39
    %v58 = vmul.f32 %v51, %v40
    %v59 = vmul.f32 %v51, %v41
    %v60 = vmul.f32 %v51, %v42
    %v61 = vmul.f32 %v51, %v43
    %v62 = vmul.f32 %v51, %v44
    %v63 = vmul.f32 %v51, %v45
    %v64 = vmul.f32 %v51, %v46
    %v65 = vmul.f32 %v51, %v47
    %v66 = vmul.f32 %v51, %v48
    %v67 = vmul.f32 %v51, %v49
    %68 = vst [vmem:[#allocation8] sm:$0xff] %v52
    %69 = vst [vmem:[#allocation8 + $0x8] sm:$0xff] %v53
    %70 = vst [vmem:[#allocation8 + $0x10] sm:$0xff] %v54
    %71 = vst [vmem:[#allocation8 + $0x18] sm:$0xff] %v55
    %72 = vst [vmem:[#allocation8 + $0x20] sm:$0xff] %v56
    %73 = vst [vmem:[#allocation8 + $0x28] sm:$0xff] %v57
    %74 = vst [vmem:[#allocation8 + $0x30] sm:$0xff] %v58
    %75 = vst [vmem:[#allocation8 + $0x38] sm:$0xff] %v59
    %76 = vst [vmem:[#allocation8 + $0x40] sm:$0xff] %v60
    %77 = vst [vmem:[#allocation8 + $0x48] sm:$0xff] %v61
    %78 = vst [vmem:[#allocation8 + $0x50] sm:$0xff] %v62
    %79 = vst [vmem:[#allocation8 + $0x58] sm:$0xff] %v63
    %80 = vst [vmem:[#allocation8 + $0x60] sm:$0xff] %v64
    %81 = vst [vmem:[#allocation8 + $0x68] sm:$0xff] %v65
    %82 = vst [vmem:[#allocation8 + $0x70] sm:$0xff] %v66
    %83 = vst [vmem:[#allocation8 + $0x78] sm:$0xff] %v67
    %v84 = vmul.f32 %v34, %v34
    %v85 = vmul.f32 %v35, %v35
    %v86 = vmul.f32 %v36, %v36
    %v87 = vmul.f32 %v37, %v37
    %v88 = vmul.f32 %v38, %v38
    %v89 = vmul.f32 %v39, %v39
    %v90 = vmul.f32 %v40, %v40
    %v91 = vmul.f32 %v41, %v41
    %v92 = vmul.f32 %v42, %v42
    %v93 = vmul.f32 %v43, %v43
    %v94 = vmul.f32 %v44, %v44
    %v95 = vmul.f32 %v45, %v45
    %v96 = vmul.f32 %v46, %v46
    %v97 = vmul.f32 %v47, %v47
    %v98 = vmul.f32 %v48, %v48
    %v99 = vmul.f32 %v49, %v49
    %v100 = vlaneseq
    %v101 = vshrl.u32 %v100, 7
    %v102 = vadd.s32 %v101, 8
    %v103 = vadd.s32 %v101, 16
    %v104 = vadd.s32 %v101, 24
    %v105 = vadd.s32 %v101, 32
    %v106 = vadd.s32 %v101, 40
    %v107 = vadd.s32 %v101, 48
    %v108 = vadd.s32 %v101, 56
    %v109 = vadd.s32 %v101, 64
    %v110 = vadd.s32 %v101, 72
    %v111 = vadd.s32 %v101, 80
    %v112 = vadd.s32 %v101, 88
    %v113 = vadd.s32 %v101, 96
    %v114 = vadd.s32 %v101, 104
    %v115 = vadd.s32 %v101, 112
    %v116 = vadd.s32 %v101, 120
    %v117 = vadd.s32 %v101, 128
    %v118 = vadd.s32 %v101, 136
    %v119 = vadd.s32 %v101, 144
    %v120 = vadd.s32 %v101, 152
    %v121 = vadd.s32 %v101, 160
    %v122 = vadd.s32 %v101, 168
    %v123 = vadd.s32 %v101, 176
    %v124 = vadd.s32 %v101, 184
    %v125 = vadd.s32 %v101, 192
    %v126 = vadd.s32 %v101, 200
    %v127 = vadd.s32 %v101, 208
    %v128 = vadd.s32 %v101, 216
    %v129 = vadd.s32 %v101, 224
    %v130 = vadd.s32 %v101, 232
    %v131 = vadd.s32 %v101, 240
    %v132 = vadd.s32 %v101, 248
    %v133 = vadd.s32 %v101, 256
    %v134 = vadd.s32 %v101, 264
    %v135 = vadd.s32 %v101, 272
    %v136 = vadd.s32 %v101, 280
    %v137 = vadd.s32 %v101, 288
    %v138 = vadd.s32 %v101, 296
    %v139 = vadd.s32 %v101, 304
    %v140 = vadd.s32 %v101, 312
    %v141 = vadd.s32 %v101, 320
    %v142 = vadd.s32 %v101, 328
    %v143 = vadd.s32 %v101, 336
    %v144 = vadd.s32 %v101, 344
    %v145 = vadd.s32 %v101, 352
    %v146 = vadd.s32 %v101, 360
    %v147 = vadd.s32 %v101, 368
    %v148 = vadd.s32 %v101, 376
    %v149 = vadd.s32 %v101, 384
    %v150 = vadd.s32 %v101, 392
    %v151 = vadd.s32 %v101, 400
    %v152 = vadd.s32 %v101, 408
    %v153 = vadd.s32 %v101, 416
    %v154 = vadd.s32 %v101, 424
    %v155 = vadd.s32 %v101, 432
    %v156 = vadd.s32 %v101, 440
    %v157 = vadd.s32 %v101, 448
    %v158 = vadd.s32 %v101, 456
    %v159 = vadd.s32 %v101, 464
    %v160 = vadd.s32 %v101, 472
    %v161 = vadd.s32 %v101, 480
    %v162 = vadd.s32 %v101, 488
    %v163 = vadd.s32 %v101, 496
    %v164 = vadd.s32 %v101, 504
    %v165 = vadd.s32 %v101, 512
    %v166 = vadd.s32 %v101, 520
    %v167 = vadd.s32 %v101, 528
    %v168 = vadd.s32 %v101, 536
    %v169 = vadd.s32 %v101, 544
    %v170 = vadd.s32 %v101, 552
    %v171 = vadd.s32 %v101, 560
    %v172 = vadd.s32 %v101, 568
    %v173 = vadd.s32 %v101, 576
    %v174 = vadd.s32 %v101, 584
    %v175 = vadd.s32 %v101, 592
    %v176 = vadd.s32 %v101, 600
    %v177 = vadd.s32 %v101, 608
    %v178 = vadd.s32 %v101, 616
    %v179 = vadd.s32 %v101, 624
    %v180 = vadd.s32 %v101, 632
    %v181 = vadd.s32 %v101, 640
    %v182 = vadd.s32 %v101, 648
    %v183 = vadd.s32 %v101, 656
    %v184 = vadd.s32 %v101, 664
    %v185 = vadd.s32 %v101, 672
    %v186 = vadd.s32 %v101, 680
    %v187 = vadd.s32 %v101, 688
    %v188 = vadd.s32 %v101, 696
    %v189 = vadd.s32 %v101, 704
    %v190 = vadd.s32 %v101, 712
    %v191 = vadd.s32 %v101, 720
    %v192 = vadd.s32 %v101, 728
    %v193 = vadd.s32 %v101, 736
    %v194 = vadd.s32 %v101, 744
    %v195 = vadd.s32 %v101, 752
    %v196 = vadd.s32 %v101, 760
    %v197 = vadd.s32 %v101, 768
    %v198 = vadd.s32 %v101, 776
    %v199 = vadd.s32 %v101, 784
    %v200 = vadd.s32 %v101, 792
    %v201 = vadd.s32 %v101, 800
    %v202 = vadd.s32 %v101, 808
    %v203 = vadd.s32 %v101, 816
    %v204 = vadd.s32 %v101, 824
    %v205 = vadd.s32 %v101, 832
    %v206 = vadd.s32 %v101, 840
    %v207 = vadd.s32 %v101, 848
    %v208 = vadd.s32 %v101, 856
    %v209 = vadd.s32 %v101, 864
    %v210 = vadd.s32 %v101, 872
    %v211 = vadd.s32 %v101, 880
    %v212 = vadd.s32 %v101, 888
    %v213 = vadd.s32 %v101, 896
    %v214 = vadd.s32 %v101, 904
    %v215 = vadd.s32 %v101, 912
    %v216 = vadd.s32 %v101, 920
    %v217 = vadd.s32 %v101, 928
    %v218 = vadd.s32 %v101, 936
    %v219 = vadd.s32 %v101, 944
    %v220 = vadd.s32 %v101, 952
    %v221 = vadd.s32 %v101, 960
    %v222 = vadd.s32 %v101, 968
    %v223 = vadd.s32 %v101, 976
    %v224 = vadd.s32 %v101, 984
    %v225 = vadd.s32 %v101, 992
    %v226 = vadd.s32 %v101, 1000
    %v227 = vadd.s32 %v101, 1008
    %v228 = vadd.s32 %v101, 1016
    %v229 = vadd.s32 %v101, 1024
    %v230 = vadd.s32 %v101, 1032
    %v231 = vadd.s32 %v101, 1040
    %v232 = vadd.s32 %v101, 1048
    %v233 = vadd.s32 %v101, 1056
    %v234 = vadd.s32 %v101, 1064
    %v235 = vadd.s32 %v101, 1072
    %v236 = vadd.s32 %v101, 1080
    %v237 = vadd.s32 %v101, 1088
    %v238 = vadd.s32 %v101, 1096
    %v239 = vadd.s32 %v101, 1104
    %v240 = vadd.s32 %v101, 1112
    %v241 = vadd.s32 %v101, 1120
    %v242 = vadd.s32 %v101, 1128
    %v243 = vadd.s32 %v101, 1136
    %v244 = vadd.s32 %v101, 1144
    %v245 = vadd.s32 %v101, 1152
    %v246 = vadd.s32 %v101, 1160
    %v247 = vadd.s32 %v101, 1168
    %v248 = vadd.s32 %v101, 1176
    %v249 = vadd.s32 %v101, 1184
    %v250 = vadd.s32 %v101, 1192
    %v251 = vadd.s32 %v101, 1200
    %v252 = vadd.s32 %v101, 1208
    %v253 = vadd.s32 %v101, 1216
    %v254 = vadd.s32 %v101, 1224
    %v255 = vadd.s32 %v101, 1232
    %v256 = vadd.s32 %v101, 1240
    %v257 = vadd.s32 %v101, 1248
    %v258 = vadd.s32 %v101, 1256
    %v259 = vadd.s32 %v101, 1264
    %v260 = vadd.s32 %v101, 1272
    %v261 = vadd.s32 %v101, 1280
    %v262 = vadd.s32 %v101, 1288
    %v263 = vadd.s32 %v101, 1296
    %v264 = vadd.s32 %v101, 1304
    %v265 = vadd.s32 %v101, 1312
    %v266 = vadd.s32 %v101, 1320
    %v267 = vadd.s32 %v101, 1328
    %v268 = vadd.s32 %v101, 1336
    %v269 = vadd.s32 %v101, 1344
    %v270 = vadd.s32 %v101, 1352
    %v271 = vadd.s32 %v101, 1360
    %v272 = vadd.s32 %v101, 1368
    %v273 = vadd.s32 %v101, 1376
    %v274 = vadd.s32 %v101, 1384
    %v275 = vadd.s32 %v101, 1392
    %v276 = vadd.s32 %v101, 1400
    %v277 = vadd.s32 %v101, 1408
    %v278 = vadd.s32 %v101, 1416
    %v279 = vadd.s32 %v101, 1424
    %v280 = vadd.s32 %v101, 1432
    %v281 = vadd.s32 %v101, 1440
    %v282 = vadd.s32 %v101, 1448
    %v283 = vadd.s32 %v101, 1456
    %v284 = vadd.s32 %v101, 1464
    %v285 = vadd.s32 %v101, 1472
    %v286 = vadd.s32 %v101, 1480
    %v287 = vadd.s32 %v101, 1488
    %v288 = vadd.s32 %v101, 1496
    %v289 = vadd.s32 %v101, 1504
    %v290 = vadd.s32 %v101, 1512
    %v291 = vadd.s32 %v101, 1520
    %v292 = vadd.s32 %v101, 1528
    %v293 = vadd.s32 %v101, 1536
    %v294 = vadd.s32 %v101, 1544
    %v295 = vadd.s32 %v101, 1552
    %v296 = vadd.s32 %v101, 1560
    %v297 = vadd.s32 %v101, 1568
    %v298 = vadd.s32 %v101, 1576
    %v299 = vadd.s32 %v101, 1584
    %v300 = vadd.s32 %v101, 1592
    %v301 = vadd.s32 %v101, 1600
    %v302 = vadd.s32 %v101, 1608
    %v303 = vadd.s32 %v101, 1616
    %v304 = vadd.s32 %v101, 1624
    %v305 = vadd.s32 %v101, 1632
    %v306 = vadd.s32 %v101, 1640
    %v307 = vadd.s32 %v101, 1648
    %v308 = vadd.s32 %v101, 1656
    %v309 = vadd.s32 %v101, 1664
    %v310 = vadd.s32 %v101, 1672
    %v311 = vadd.s32 %v101, 1680
    %v312 = vadd.s32 %v101, 1688
    %v313 = vadd.s32 %v101, 1696
    %v314 = vadd.s32 %v101, 1704
    %v315 = vadd.s32 %v101, 1712
    %v316 = vadd.s32 %v101, 1720
    %v317 = vadd.s32 %v101, 1728
    %v318 = vadd.s32 %v101, 1736
    %v319 = vadd.s32 %v101, 1744
    %v320 = vadd.s32 %v101, 1752
    %v321 = vadd.s32 %v101, 1760
    %v322 = vadd.s32 %v101, 1768
    %v323 = vadd.s32 %v101, 1776
    %v324 = vadd.s32 %v101, 1784
    %v325 = vadd.s32 %v101, 1792
    %v326 = vadd.s32 %v101, 1800
    %v327 = vadd.s32 %v101, 1808
    %v328 = vadd.s32 %v101, 1816
    %v329 = vadd.s32 %v101, 1824
    %v330 = vadd.s32 %v101, 1832
    %v331 = vadd.s32 %v101, 1840
    %v332 = vadd.s32 %v101, 1848
    %v333 = vadd.s32 %v101, 1856
    %v334 = vadd.s32 %v101, 1864
    %v335 = vadd.s32 %v101, 1872
    %v336 = vadd.s32 %v101, 1880
    %v337 = vadd.s32 %v101, 1888
    %v338 = vadd.s32 %v101, 1896
    %v339 = vadd.s32 %v101, 1904
    %v340 = vadd.s32 %v101, 1912
    %v341 = vadd.s32 %v101, 1920
    %v342 = vadd.s32 %v101, 1928
    %v343 = vadd.s32 %v101, 1936
    %v344 = vadd.s32 %v101, 1944
    %v345 = vadd.s32 %v101, 1952
    %v346 = vadd.s32 %v101, 1960
    %v347 = vadd.s32 %v101, 1968
    %v348 = vadd.s32 %v101, 1976
    %v349 = vadd.s32 %v101, 1984
    %v350 = vadd.s32 %v101, 1992
    %v351 = vadd.s32 %v101, 2000
    %v352 = vadd.s32 %v101, 2008
    %v353 = vadd.s32 %v101, 2016
    %v354 = vadd.s32 %v101, 2024
    %v355 = vadd.s32 %v101, 2032
    %v356 = vadd.s32 %v101, 2040
    %v357 = vlaneseq
    %v358 = vand.u32 %v357, 127
    %v359 = vmul.u32 %v358, 16
    %vm360 = vcmp.ge.s32.totalorder %v101, %v359
    %vm361 = vcmp.ge.s32.totalorder %v102, %v359
    %vm362 = vcmp.ge.s32.totalorder %v103, %v359
    %vm363 = vcmp.ge.s32.totalorder %v104, %v359
    %vm364 = vcmp.ge.s32.totalorder %v105, %v359
    %vm365 = vcmp.ge.s32.totalorder %v106, %v359
    %vm366 = vcmp.ge.s32.totalorder %v107, %v359
    %vm367 = vcmp.ge.s32.totalorder %v108, %v359
    %vm368 = vcmp.ge.s32.totalorder %v109, %v359
    %vm369 = vcmp.ge.s32.totalorder %v110, %v359
    %vm370 = vcmp.ge.s32.totalorder %v111, %v359
    %vm371 = vcmp.ge.s32.totalorder %v112, %v359
    %vm372 = vcmp.ge.s32.totalorder %v113, %v359
    %vm373 = vcmp.ge.s32.totalorder %v114, %v359
    %vm374 = vcmp.ge.s32.totalorder %v115, %v359
    %vm375 = vcmp.ge.s32.totalorder %v116, %v359
    %vm376 = vcmp.ge.s32.totalorder %v117, %v359
    %vm377 = vcmp.ge.s32.totalorder %v118, %v359
    %vm378 = vcmp.ge.s32.totalorder %v119, %v359
    %vm379 = vcmp.ge.s32.totalorder %v120, %v359
    %vm380 = vcmp.ge.s32.totalorder %v121, %v359
    %vm381 = vcmp.ge.s32.totalorder %v122, %v359
    %vm382 = vcmp.ge.s32.totalorder %v123, %v359
    %vm383 = vcmp.ge.s32.totalorder %v124, %v359
    %vm384 = vcmp.ge.s32.totalorder %v125, %v359
    %vm385 = vcmp.ge.s32.totalorder %v126, %v359
    %vm386 = vcmp.ge.s32.totalorder %v127, %v359
    %vm387 = vcmp.ge.s32.totalorder %v128, %v359
    %vm388 = vcmp.ge.s32.totalorder %v129, %v359
    %vm389 = vcmp.ge.s32.totalorder %v130, %v359
    %vm390 = vcmp.ge.s32.totalorder %v131, %v359
    %vm391 = vcmp.ge.s32.totalorder %v132, %v359
    %vm392 = vcmp.ge.s32.totalorder %v133, %v359
    %vm393 = vcmp.ge.s32.totalorder %v134, %v359
    %vm394 = vcmp.ge.s32.totalorder %v135, %v359
    %vm395 = vcmp.ge.s32.totalorder %v136, %v359
    %vm396 = vcmp.ge.s32.totalorder %v137, %v359
    %vm397 = vcmp.ge.s32.totalorder %v138, %v359
    %vm398 = vcmp.ge.s32.totalorder %v139, %v359
    %vm399 = vcmp.ge.s32.totalorder %v140, %v359
    %vm400 = vcmp.ge.s32.totalorder %v141, %v359
    %vm401 = vcmp.ge.s32.totalorder %v142, %v359
    %vm402 = vcmp.ge.s32.totalorder %v143, %v359
    %vm403 = vcmp.ge.s32.totalorder %v144, %v359
    %vm404 = vcmp.ge.s32.totalorder %v145, %v359
    %vm405 = vcmp.ge.s32.totalorder %v146, %v359
    %vm406 = vcmp.ge.s32.totalorder %v147, %v359
    %vm407 = vcmp.ge.s32.totalorder %v148, %v359
    %vm408 = vcmp.ge.s32.totalorder %v149, %v359
    %vm409 = vcmp.ge.s32.totalorder %v150, %v359
    %vm410 = vcmp.ge.s32.totalorder %v151, %v359
    %vm411 = vcmp.ge.s32.totalorder %v152, %v359
    %vm412 = vcmp.ge.s32.totalorder %v153, %v359
    %vm413 = vcmp.ge.s32.totalorder %v154, %v359
    %vm414 = vcmp.ge.s32.totalorder %v155, %v359
    %vm415 = vcmp.ge.s32.totalorder %v156, %v359
    %vm416 = vcmp.ge.s32.totalorder %v157, %v359
    %vm417 = vcmp.ge.s32.totalorder %v158, %v359
    %vm418 = vcmp.ge.s32.totalorder %v159, %v359
    %vm419 = vcmp.ge.s32.totalorder %v160, %v359
    %vm420 = vcmp.ge.s32.totalorder %v161, %v359
    %vm421 = vcmp.ge.s32.totalorder %v162, %v359
    %vm422 = vcmp.ge.s32.totalorder %v163, %v359
    %vm423 = vcmp.ge.s32.totalorder %v164, %v359
    %vm424 = vcmp.ge.s32.totalorder %v165, %v359
    %vm425 = vcmp.ge.s32.totalorder %v166, %v359
    %vm426 = vcmp.ge.s32.totalorder %v167, %v359
    %vm427 = vcmp.ge.s32.totalorder %v168, %v359
    %vm428 = vcmp.ge.s32.totalorder %v169, %v359
    %vm429 = vcmp.ge.s32.totalorder %v170, %v359
    %vm430 = vcmp.ge.s32.totalorder %v171, %v359
    %vm431 = vcmp.ge.s32.totalorder %v172, %v359
    %vm432 = vcmp.ge.s32.totalorder %v173, %v359
    %vm433 = vcmp.ge.s32.totalorder %v174, %v359
    %vm434 = vcmp.ge.s32.totalorder %v175, %v359
    %vm435 = vcmp.ge.s32.totalorder %v176, %v359
    %vm436 = vcmp.ge.s32.totalorder %v177, %v359
    %vm437 = vcmp.ge.s32.totalorder %v178, %v359
    %vm438 = vcmp.ge.s32.totalorder %v179, %v359
    %vm439 = vcmp.ge.s32.totalorder %v180, %v359
    %vm440 = vcmp.ge.s32.totalorder %v181, %v359
    %vm441 = vcmp.ge.s32.totalorder %v182, %v359
    %vm442 = vcmp.ge.s32.totalorder %v183, %v359
    %vm443 = vcmp.ge.s32.totalorder %v184, %v359
    %vm444 = vcmp.ge.s32.totalorder %v185, %v359
    %vm445 = vcmp.ge.s32.totalorder %v186, %v359
    %vm446 = vcmp.ge.s32.totalorder %v187, %v359
    %vm447 = vcmp.ge.s32.totalorder %v188, %v359
    %vm448 = vcmp.ge.s32.totalorder %v189, %v359
    %vm449 = vcmp.ge.s32.totalorder %v190, %v359
    %vm450 = vcmp.ge.s32.totalorder %v191, %v359
    %vm451 = vcmp.ge.s32.totalorder %v192, %v359
    %vm452 = vcmp.ge.s32.totalorder %v193, %v359
    %vm453 = vcmp.ge.s32.totalorder %v194, %v359
    %vm454 = vcmp.ge.s32.totalorder %v195, %v359
    %vm455 = vcmp.ge.s32.totalorder %v196, %v359
    %vm456 = vcmp.ge.s32.totalorder %v197, %v359
    %vm457 = vcmp.ge.s32.totalorder %v198, %v359
    %vm458 = vcmp.ge.s32.totalorder %v199, %v359
    %vm459 = vcmp.ge.s32.totalorder %v200, %v359
    %vm460 = vcmp.ge.s32.totalorder %v201, %v359
    %vm461 = vcmp.ge.s32.totalorder %v202, %v359
    %vm462 = vcmp.ge.s32.totalorder %v203, %v359
    %vm463 = vcmp.ge.s32.totalorder %v204, %v359
    %vm464 = vcmp.ge.s32.totalorder %v205, %v359
    %vm465 = vcmp.ge.s32.totalorder %v206, %v359
    %vm466 = vcmp.ge.s32.totalorder %v207, %v359
    %vm467 = vcmp.ge.s32.totalorder %v208, %v359
    %vm468 = vcmp.ge.s32.totalorder %v209, %v359
    %vm469 = vcmp.ge.s32.totalorder %v210, %v359
    %vm470 = vcmp.ge.s32.totalorder %v211, %v359
    %vm471 = vcmp.ge.s32.totalorder %v212, %v359
    %vm472 = vcmp.ge.s32.totalorder %v213, %v359
    %vm473 = vcmp.ge.s32.totalorder %v214, %v359
    %vm474 = vcmp.ge.s32.totalorder %v215, %v359
    %vm475 = vcmp.ge.s32.totalorder %v216, %v359
    %vm476 = vcmp.ge.s32.totalorder %v217, %v359
    %vm477 = vcmp.ge.s32.totalorder %v218, %v359
    %vm478 = vcmp.ge.s32.totalorder %v219, %v359
    %vm479 = vcmp.ge.s32.totalorder %v220, %v359
    %vm480 = vcmp.ge.s32.totalorder %v221, %v359
    %vm481 = vcmp.ge.s32.totalorder %v222, %v359
    %vm482 = vcmp.ge.s32.totalorder %v223, %v359
    %vm483 = vcmp.ge.s32.totalorder %v224, %v359
    %vm484 = vcmp.ge.s32.totalorder %v225, %v359
    %vm485 = vcmp.ge.s32.totalorder %v226, %v359
    %vm486 = vcmp.ge.s32.totalorder %v227, %v359
    %vm487 = vcmp.ge.s32.totalorder %v228, %v359
    %vm488 = vcmp.ge.s32.totalorder %v229, %v359
    %vm489 = vcmp.ge.s32.totalorder %v230, %v359
    %vm490 = vcmp.ge.s32.totalorder %v231, %v359
    %vm491 = vcmp.ge.s32.totalorder %v232, %v359
    %vm492 = vcmp.ge.s32.totalorder %v233, %v359
    %vm493 = vcmp.ge.s32.totalorder %v234, %v359
    %vm494 = vcmp.ge.s32.totalorder %v235, %v359
    %vm495 = vcmp.ge.s32.totalorder %v236, %v359
    %vm496 = vcmp.ge.s32.totalorder %v237, %v359
    %vm497 = vcmp.ge.s32.totalorder %v238, %v359
    %vm498 = vcmp.ge.s32.totalorder %v239, %v359
    %vm499 = vcmp.ge.s32.totalorder %v240, %v359
    %vm500 = vcmp.ge.s32.totalorder %v241, %v359
    %vm501 = vcmp.ge.s32.totalorder %v242, %v359
    %vm502 = vcmp.ge.s32.totalorder %v243, %v359
    %vm503 = vcmp.ge.s32.totalorder %v244, %v359
    %vm504 = vcmp.ge.s32.totalorder %v245, %v359
    %vm505 = vcmp.ge.s32.totalorder %v246, %v359
    %vm506 = vcmp.ge.s32.totalorder %v247, %v359
    %vm507 = vcmp.ge.s32.totalorder %v248, %v359
    %vm508 = vcmp.ge.s32.totalorder %v249, %v359
    %vm509 = vcmp.ge.s32.totalorder %v250, %v359
    %vm510 = vcmp.ge.s32.totalorder %v251, %v359
    %vm511 = vcmp.ge.s32.totalorder %v252, %v359
    %vm512 = vcmp.ge.s32.totalorder %v253, %v359
    %vm513 = vcmp.ge.s32.totalorder %v254, %v359
    %vm514 = vcmp.ge.s32.totalorder %v255, %v359
    %vm515 = vcmp.ge.s32.totalorder %v256, %v359
    %vm516 = vcmp.ge.s32.totalorder %v257, %v359
    %vm517 = vcmp.ge.s32.totalorder %v258, %v359
    %vm518 = vcmp.ge.s32.totalorder %v259, %v359
    %vm519 = vcmp.ge.s32.totalorder %v260, %v359
    %vm520 = vcmp.ge.s32.totalorder %v261, %v359
    %vm521 = vcmp.ge.s32.totalorder %v262, %v359
    %vm522 = vcmp.ge.s32.totalorder %v263, %v359
    %vm523 = vcmp.ge.s32.totalorder %v264, %v359
    %vm524 = vcmp.ge.s32.totalorder %v265, %v359
    %vm525 = vcmp.ge.s32.totalorder %v266, %v359
    %vm526 = vcmp.ge.s32.totalorder %v267, %v359
    %vm527 = vcmp.ge.s32.totalorder %v268, %v359
    %vm528 = vcmp.ge.s32.totalorder %v269, %v359
    %vm529 = vcmp.ge.s32.totalorder %v270, %v359
    %vm530 = vcmp.ge.s32.totalorder %v271, %v359
    %vm531 = vcmp.ge.s32.totalorder %v272, %v359
    %vm532 = vcmp.ge.s32.totalorder %v273, %v359
    %vm533 = vcmp.ge.s32.totalorder %v274, %v359
    %vm534 = vcmp.ge.s32.totalorder %v275, %v359
    %vm535 = vcmp.ge.s32.totalorder %v276, %v359
    %vm536 = vcmp.ge.s32.totalorder %v277, %v359
    %vm537 = vcmp.ge.s32.totalorder %v278, %v359
    %vm538 = vcmp.ge.s32.totalorder %v279, %v359
    %vm539 = vcmp.ge.s32.totalorder %v280, %v359
    %vm540 = vcmp.ge.s32.totalorder %v281, %v359
    %vm541 = vcmp.ge.s32.totalorder %v282, %v359
    %vm542 = vcmp.ge.s32.totalorder %v283, %v359
    %vm543 = vcmp.ge.s32.totalorder %v284, %v359
    %vm544 = vcmp.ge.s32.totalorder %v285, %v359
    %vm545 = vcmp.ge.s32.totalorder %v286, %v359
    %vm546 = vcmp.ge.s32.totalorder %v287, %v359
    %vm547 = vcmp.ge.s32.totalorder %v288, %v359
    %vm548 = vcmp.ge.s32.totalorder %v289, %v359
    %vm549 = vcmp.ge.s32.totalorder %v290, %v359
    %vm550 = vcmp.ge.s32.totalorder %v291, %v359
    %vm551 = vcmp.ge.s32.totalorder %v292, %v359
    %vm552 = vcmp.ge.s32.totalorder %v293, %v359
    %vm553 = vcmp.ge.s32.totalorder %v294, %v359
    %vm554 = vcmp.ge.s32.totalorder %v295, %v359
    %vm555 = vcmp.ge.s32.totalorder %v296, %v359
    %vm556 = vcmp.ge.s32.totalorder %v297, %v359
    %vm557 = vcmp.ge.s32.totalorder %v298, %v359
    %vm558 = vcmp.ge.s32.totalorder %v299, %v359
    %vm559 = vcmp.ge.s32.totalorder %v300, %v359
    %vm560 = vcmp.ge.s32.totalorder %v301, %v359
    %vm561 = vcmp.ge.s32.totalorder %v302, %v359
    %vm562 = vcmp.ge.s32.totalorder %v303, %v359
    %vm563 = vcmp.ge.s32.totalorder %v304, %v359
    %vm564 = vcmp.ge.s32.totalorder %v305, %v359
    %vm565 = vcmp.ge.s32.totalorder %v306, %v359
    %vm566 = vcmp.ge.s32.totalorder %v307, %v359
    %vm567 = vcmp.ge.s32.totalorder %v308, %v359
    %vm568 = vcmp.ge.s32.totalorder %v309, %v359
    %vm569 = vcmp.ge.s32.totalorder %v310, %v359
    %vm570 = vcmp.ge.s32.totalorder %v311, %v359
    %vm571 = vcmp.ge.s32.totalorder %v312, %v359
    %vm572 = vcmp.ge.s32.totalorder %v313, %v359
    %vm573 = vcmp.ge.s32.totalorder %v314, %v359
    %vm574 = vcmp.ge.s32.totalorder %v315, %v359
    %vm575 = vcmp.ge.s32.totalorder %v316, %v359
    %vm576 = vcmp.ge.s32.totalorder %v317, %v359
    %vm577 = vcmp.ge.s32.totalorder %v318, %v359
    %vm578 = vcmp.ge.s32.totalorder %v319, %v359
    %vm579 = vcmp.ge.s32.totalorder %v320, %v359
    %vm580 = vcmp.ge.s32.totalorder %v321, %v359
    %vm581 = vcmp.ge.s32.totalorder %v322, %v359
    %vm582 = vcmp.ge.s32.totalorder %v323, %v359
    %vm583 = vcmp.ge.s32.totalorder %v324, %v359
    %vm584 = vcmp.ge.s32.totalorder %v325, %v359
    %vm585 = vcmp.ge.s32.totalorder %v326, %v359
    %vm586 = vcmp.ge.s32.totalorder %v327, %v359
    %vm587 = vcmp.ge.s32.totalorder %v328, %v359
    %vm588 = vcmp.ge.s32.totalorder %v329, %v359
    %vm589 = vcmp.ge.s32.totalorder %v330, %v359
    %vm590 = vcmp.ge.s32.totalorder %v331, %v359
    %vm591 = vcmp.ge.s32.totalorder %v332, %v359
    %vm592 = vcmp.ge.s32.totalorder %v333, %v359
    %vm593 = vcmp.ge.s32.totalorder %v334, %v359
    %vm594 = vcmp.ge.s32.totalorder %v335, %v359
    %vm595 = vcmp.ge.s32.totalorder %v336, %v359
    %vm596 = vcmp.ge.s32.totalorder %v337, %v359
    %vm597 = vcmp.ge.s32.totalorder %v338, %v359
    %vm598 = vcmp.ge.s32.totalorder %v339, %v359
    %vm599 = vcmp.ge.s32.totalorder %v340, %v359
    %vm600 = vcmp.ge.s32.totalorder %v341, %v359
    %vm601 = vcmp.ge.s32.totalorder %v342, %v359
    %vm602 = vcmp.ge.s32.totalorder %v343, %v359
    %vm603 = vcmp.ge.s32.totalorder %v344, %v359
    %vm604 = vcmp.ge.s32.totalorder %v345, %v359
    %vm605 = vcmp.ge.s32.totalorder %v346, %v359
    %vm606 = vcmp.ge.s32.totalorder %v347, %v359
    %vm607 = vcmp.ge.s32.totalorder %v348, %v359
    %vm608 = vcmp.ge.s32.totalorder %v349, %v359
    %vm609 = vcmp.ge.s32.totalorder %v350, %v359
    %vm610 = vcmp.ge.s32.totalorder %v351, %v359
    %vm611 = vcmp.ge.s32.totalorder %v352, %v359
    %vm612 = vcmp.ge.s32.totalorder %v353, %v359
    %vm613 = vcmp.ge.s32.totalorder %v354, %v359
    %vm614 = vcmp.ge.s32.totalorder %v355, %v359
    %vm615 = vcmp.ge.s32.totalorder %v356, %v359
    %v616 = vadd.s32 %v359, 16
    %vm617 = vcmp.lt.s32.totalorder %v101, %v616
    %vm618 = vcmp.lt.s32.totalorder %v102, %v616
    %vm619 = vcmp.lt.s32.totalorder %v103, %v616
    %vm620 = vcmp.lt.s32.totalorder %v104, %v616
    %vm621 = vcmp.lt.s32.totalorder %v105, %v616
    %vm622 = vcmp.lt.s32.totalorder %v106, %v616
    %vm623 = vcmp.lt.s32.totalorder %v107, %v616
    %vm624 = vcmp.lt.s32.totalorder %v108, %v616
    %vm625 = vcmp.lt.s32.totalorder %v109, %v616
    %vm626 = vcmp.lt.s32.totalorder %v110, %v616
    %vm627 = vcmp.lt.s32.totalorder %v111, %v616
    %vm628 = vcmp.lt.s32.totalorder %v112, %v616
    %vm629 = vcmp.lt.s32.totalorder %v113, %v616
    %vm630 = vcmp.lt.s32.totalorder %v114, %v616
    %vm631 = vcmp.lt.s32.totalorder %v115, %v616
    %vm632 = vcmp.lt.s32.totalorder %v116, %v616
    %vm633 = vcmp.lt.s32.totalorder %v117, %v616
    %vm634 = vcmp.lt.s32.totalorder %v118, %v616
    %vm635 = vcmp.lt.s32.totalorder %v119, %v616
    %vm636 = vcmp.lt.s32.totalorder %v120, %v616
    %vm637 = vcmp.lt.s32.totalorder %v121, %v616
    %vm638 = vcmp.lt.s32.totalorder %v122, %v616
    %vm639 = vcmp.lt.s32.totalorder %v123, %v616
    %vm640 = vcmp.lt.s32.totalorder %v124, %v616
    %vm641 = vcmp.lt.s32.totalorder %v125, %v616
    %vm642 = vcmp.lt.s32.totalorder %v126, %v616
    %vm643 = vcmp.lt.s32.totalorder %v127, %v616
    %vm644 = vcmp.lt.s32.totalorder %v128, %v616
    %vm645 = vcmp.lt.s32.totalorder %v129, %v616
    %vm646 = vcmp.lt.s32.totalorder %v130, %v616
    %vm647 = vcmp.lt.s32.totalorder %v131, %v616
    %vm648 = vcmp.lt.s32.totalorder %v132, %v616
    %vm649 = vcmp.lt.s32.totalorder %v133, %v616
    %vm650 = vcmp.lt.s32.totalorder %v134, %v616
    %vm651 = vcmp.lt.s32.totalorder %v135, %v616
    %vm652 = vcmp.lt.s32.totalorder %v136, %v616
    %vm653 = vcmp.lt.s32.totalorder %v137, %v616
    %vm654 = vcmp.lt.s32.totalorder %v138, %v616
    %vm655 = vcmp.lt.s32.totalorder %v139, %v616
    %vm656 = vcmp.lt.s32.totalorder %v140, %v616
    %vm657 = vcmp.lt.s32.totalorder %v141, %v616
    %vm658 = vcmp.lt.s32.totalorder %v142, %v616
    %vm659 = vcmp.lt.s32.totalorder %v143, %v616
    %vm660 = vcmp.lt.s32.totalorder %v144, %v616
    %vm661 = vcmp.lt.s32.totalorder %v145, %v616
    %vm662 = vcmp.lt.s32.totalorder %v146, %v616
    %vm663 = vcmp.lt.s32.totalorder %v147, %v616
    %vm664 = vcmp.lt.s32.totalorder %v148, %v616
    %vm665 = vcmp.lt.s32.totalorder %v149, %v616
    %vm666 = vcmp.lt.s32.totalorder %v150, %v616
    %vm667 = vcmp.lt.s32.totalorder %v151, %v616
    %vm668 = vcmp.lt.s32.totalorder %v152, %v616
    %vm669 = vcmp.lt.s32.totalorder %v153, %v616
    %vm670 = vcmp.lt.s32.totalorder %v154, %v616
    %vm671 = vcmp.lt.s32.totalorder %v155, %v616
    %vm672 = vcmp.lt.s32.totalorder %v156, %v616
    %vm673 = vcmp.lt.s32.totalorder %v157, %v616
    %vm674 = vcmp.lt.s32.totalorder %v158, %v616
    %vm675 = vcmp.lt.s32.totalorder %v159, %v616
    %vm676 = vcmp.lt.s32.totalorder %v160, %v616
    %vm677 = vcmp.lt.s32.totalorder %v161, %v616
    %vm678 = vcmp.lt.s32.totalorder %v162, %v616
    %vm679 = vcmp.lt.s32.totalorder %v163, %v616
    %vm680 = vcmp.lt.s32.totalorder %v164, %v616
    %vm681 = vcmp.lt.s32.totalorder %v165, %v616
    %vm682 = vcmp.lt.s32.totalorder %v166, %v616
    %vm683 = vcmp.lt.s32.totalorder %v167, %v616
    %vm684 = vcmp.lt.s32.totalorder %v168, %v616
    %vm685 = vcmp.lt.s32.totalorder %v169, %v616
    %vm686 = vcmp.lt.s32.totalorder %v170, %v616
    %vm687 = vcmp.lt.s32.totalorder %v171, %v616
    %vm688 = vcmp.lt.s32.totalorder %v172, %v616
    %vm689 = vcmp.lt.s32.totalorder %v173, %v616
    %vm690 = vcmp.lt.s32.totalorder %v174, %v616
    %vm691 = vcmp.lt.s32.totalorder %v175, %v616
    %vm692 = vcmp.lt.s32.totalorder %v176, %v616
    %vm693 = vcmp.lt.s32.totalorder %v177, %v616
    %vm694 = vcmp.lt.s32.totalorder %v178, %v616
    %vm695 = vcmp.lt.s32.totalorder %v179, %v616
    %vm696 = vcmp.lt.s32.totalorder %v180, %v616
    %vm697 = vcmp.lt.s32.totalorder %v181, %v616
    %vm698 = vcmp.lt.s32.totalorder %v182, %v616
    %vm699 = vcmp.lt.s32.totalorder %v183, %v616
    %vm700 = vcmp.lt.s32.totalorder %v184, %v616
    %vm701 = vcmp.lt.s32.totalorder %v185, %v616
    %vm702 = vcmp.lt.s32.totalorder %v186, %v616
    %vm703 = vcmp.lt.s32.totalorder %v187, %v616
    %vm704 = vcmp.lt.s32.totalorder %v188, %v616
    %vm705 = vcmp.lt.s32.totalorder %v189, %v616
    %vm706 = vcmp.lt.s32.totalorder %v190, %v616
    %vm707 = vcmp.lt.s32.totalorder %v191, %v616
    %vm708 = vcmp.lt.s32.totalorder %v192, %v616
    %vm709 = vcmp.lt.s32.totalorder %v193, %v616
    %vm710 = vcmp.lt.s32.totalorder %v194, %v616
    %vm711 = vcmp.lt.s32.totalorder %v195, %v616
    %vm712 = vcmp.lt.s32.totalorder %v196, %v616
    %vm713 = vcmp.lt.s32.totalorder %v197, %v616
    %vm714 = vcmp.lt.s32.totalorder %v198, %v616
    %vm715 = vcmp.lt.s32.totalorder %v199, %v616
    %vm716 = vcmp.lt.s32.totalorder %v200, %v616
    %vm717 = vcmp.lt.s32.totalorder %v201, %v616
    %vm718 = vcmp.lt.s32.totalorder %v202, %v616
    %vm719 = vcmp.lt.s32.totalorder %v203, %v616
    %vm720 = vcmp.lt.s32.totalorder %v204, %v616
    %vm721 = vcmp.lt.s32.totalorder %v205, %v616
    %vm722 = vcmp.lt.s32.totalorder %v206, %v616
    %vm723 = vcmp.lt.s32.totalorder %v207, %v616
    %vm724 = vcmp.lt.s32.totalorder %v208, %v616
    %vm725 = vcmp.lt.s32.totalorder %v209, %v616
    %vm726 = vcmp.lt.s32.totalorder %v210, %v616
    %vm727 = vcmp.lt.s32.totalorder %v211, %v616
    %vm728 = vcmp.lt.s32.totalorder %v212, %v616
    %vm729 = vcmp.lt.s32.totalorder %v213, %v616
    %vm730 = vcmp.lt.s32.totalorder %v214, %v616
    %vm731 = vcmp.lt.s32.totalorder %v215, %v616
    %vm732 = vcmp.lt.s32.totalorder %v216, %v616
    %vm733 = vcmp.lt.s32.totalorder %v217, %v616
    %vm734 = vcmp.lt.s32.totalorder %v218, %v616
    %vm735 = vcmp.lt.s32.totalorder %v219, %v616
    %vm736 = vcmp.lt.s32.totalorder %v220, %v616
    %vm737 = vcmp.lt.s32.totalorder %v221, %v616
    %vm738 = vcmp.lt.s32.totalorder %v222, %v616
    %vm739 = vcmp.lt.s32.totalorder %v223, %v616
    %vm740 = vcmp.lt.s32.totalorder %v224, %v616
    %vm741 = vcmp.lt.s32.totalorder %v225, %v616
    %vm742 = vcmp.lt.s32.totalorder %v226, %v616
    %vm743 = vcmp.lt.s32.totalorder %v227, %v616
    %vm744 = vcmp.lt.s32.totalorder %v228, %v616
    %vm745 = vcmp.lt.s32.totalorder %v229, %v616
    %vm746 = vcmp.lt.s32.totalorder %v230, %v616
    %vm747 = vcmp.lt.s32.totalorder %v231, %v616
    %vm748 = vcmp.lt.s32.totalorder %v232, %v616
    %vm749 = vcmp.lt.s32.totalorder %v233, %v616
    %vm750 = vcmp.lt.s32.totalorder %v234, %v616
    %vm751 = vcmp.lt.s32.totalorder %v235, %v616
    %vm752 = vcmp.lt.s32.totalorder %v236, %v616
    %vm753 = vcmp.lt.s32.totalorder %v237, %v616
    %vm754 = vcmp.lt.s32.totalorder %v238, %v616
    %vm755 = vcmp.lt.s32.totalorder %v239, %v616
    %vm756 = vcmp.lt.s32.totalorder %v240, %v616
    %vm757 = vcmp.lt.s32.totalorder %v241, %v616
    %vm758 = vcmp.lt.s32.totalorder %v242, %v616
    %vm759 = vcmp.lt.s32.totalorder %v243, %v616
    %vm760 = vcmp.lt.s32.totalorder %v244, %v616
    %vm761 = vcmp.lt.s32.totalorder %v245, %v616
    %vm762 = vcmp.lt.s32.totalorder %v246, %v616
    %vm763 = vcmp.lt.s32.totalorder %v247, %v616
    %vm764 = vcmp.lt.s32.totalorder %v248, %v616
    %vm765 = vcmp.lt.s32.totalorder %v249, %v616
    %vm766 = vcmp.lt.s32.totalorder %v250, %v616
    %vm767 = vcmp.lt.s32.totalorder %v251, %v616
    %vm768 = vcmp.lt.s32.totalorder %v252, %v616
    %vm769 = vcmp.lt.s32.totalorder %v253, %v616
    %vm770 = vcmp.lt.s32.totalorder %v254, %v616
    %vm771 = vcmp.lt.s32.totalorder %v255, %v616
    %vm772 = vcmp.lt.s32.totalorder %v256, %v616
    %vm773 = vcmp.lt.s32.totalorder %v257, %v616
    %vm774 = vcmp.lt.s32.totalorder %v258, %v616
    %vm775 = vcmp.lt.s32.totalorder %v259, %v616
    %vm776 = vcmp.lt.s32.totalorder %v260, %v616
    %vm777 = vcmp.lt.s32.totalorder %v261, %v616
    %vm778 = vcmp.lt.s32.totalorder %v262, %v616
    %vm779 = vcmp.lt.s32.totalorder %v263, %v616
    %vm780 = vcmp.lt.s32.totalorder %v264, %v616
    %vm781 = vcmp.lt.s32.totalorder %v265, %v616
    %vm782 = vcmp.lt.s32.totalorder %v266, %v616
    %vm783 = vcmp.lt.s32.totalorder %v267, %v616
    %vm784 = vcmp.lt.s32.totalorder %v268, %v616
    %vm785 = vcmp.lt.s32.totalorder %v269, %v616
    %vm786 = vcmp.lt.s32.totalorder %v270, %v616
    %vm787 = vcmp.lt.s32.totalorder %v271, %v616
    %vm788 = vcmp.lt.s32.totalorder %v272, %v616
    %vm789 = vcmp.lt.s32.totalorder %v273, %v616
    %vm790 = vcmp.lt.s32.totalorder %v274, %v616
    %vm791 = vcmp.lt.s32.totalorder %v275, %v616
    %vm792 = vcmp.lt.s32.totalorder %v276, %v616
    %vm793 = vcmp.lt.s32.totalorder %v277, %v616
    %vm794 = vcmp.lt.s32.totalorder %v278, %v616
    %vm795 = vcmp.lt.s32.totalorder %v279, %v616
    %vm796 = vcmp.lt.s32.totalorder %v280, %v616
    %vm797 = vcmp.lt.s32.totalorder %v281, %v616
    %vm798 = vcmp.lt.s32.totalorder %v282, %v616
    %vm799 = vcmp.lt.s32.totalorder %v283, %v616
    %vm800 = vcmp.lt.s32.totalorder %v284, %v616
    %vm801 = vcmp.lt.s32.totalorder %v285, %v616
    %vm802 = vcmp.lt.s32.totalorder %v286, %v616
    %vm803 = vcmp.lt.s32.totalorder %v287, %v616
    %vm804 = vcmp.lt.s32.totalorder %v288, %v616
    %vm805 = vcmp.lt.s32.totalorder %v289, %v616
    %vm806 = vcmp.lt.s32.totalorder %v290, %v616
    %vm807 = vcmp.lt.s32.totalorder %v291, %v616
    %vm808 = vcmp.lt.s32.totalorder %v292, %v616
    %vm809 = vcmp.lt.s32.totalorder %v293, %v616
    %vm810 = vcmp.lt.s32.totalorder %v294, %v616
    %vm811 = vcmp.lt.s32.totalorder %v295, %v616
    %vm812 = vcmp.lt.s32.totalorder %v296, %v616
    %vm813 = vcmp.lt.s32.totalorder %v297, %v616
    %vm814 = vcmp.lt.s32.totalorder %v298, %v616
    %vm815 = vcmp.lt.s32.totalorder %v299, %v616
    %vm816 = vcmp.lt.s32.totalorder %v300, %v616
    %vm817 = vcmp.lt.s32.totalorder %v301, %v616
    %vm818 = vcmp.lt.s32.totalorder %v302, %v616
    %vm819 = vcmp.lt.s32.totalorder %v303, %v616
    %vm820 = vcmp.lt.s32.totalorder %v304, %v616
    %vm821 = vcmp.lt.s32.totalorder %v305, %v616
    %vm822 = vcmp.lt.s32.totalorder %v306, %v616
    %vm823 = vcmp.lt.s32.totalorder %v307, %v616
    %vm824 = vcmp.lt.s32.totalorder %v308, %v616
    %vm825 = vcmp.lt.s32.totalorder %v309, %v616
    %vm826 = vcmp.lt.s32.totalorder %v310, %v616
    %vm827 = vcmp.lt.s32.totalorder %v311, %v616
    %vm828 = vcmp.lt.s32.totalorder %v312, %v616
    %vm829 = vcmp.lt.s32.totalorder %v313, %v616
    %vm830 = vcmp.lt.s32.totalorder %v314, %v616
    %vm831 = vcmp.lt.s32.totalorder %v315, %v616
    %vm832 = vcmp.lt.s32.totalorder %v316, %v616
    %vm833 = vcmp.lt.s32.totalorder %v317, %v616
    %vm834 = vcmp.lt.s32.totalorder %v318, %v616
    %vm835 = vcmp.lt.s32.totalorder %v319, %v616
    %vm836 = vcmp.lt.s32.totalorder %v320, %v616
    %vm837 = vcmp.lt.s32.totalorder %v321, %v616
    %vm838 = vcmp.lt.s32.totalorder %v322, %v616
    %vm839 = vcmp.lt.s32.totalorder %v323, %v616
    %vm840 = vcmp.lt.s32.totalorder %v324, %v616
    %vm841 = vcmp.lt.s32.totalorder %v325, %v616
    %vm842 = vcmp.lt.s32.totalorder %v326, %v616
    %vm843 = vcmp.lt.s32.totalorder %v327, %v616
    %vm844 = vcmp.lt.s32.totalorder %v328, %v616
    %vm845 = vcmp.lt.s32.totalorder %v329, %v616
    %vm846 = vcmp.lt.s32.totalorder %v330, %v616
    %vm847 = vcmp.lt.s32.totalorder %v331, %v616
    %vm848 = vcmp.lt.s32.totalorder %v332, %v616
    %vm849 = vcmp.lt.s32.totalorder %v333, %v616
    %vm850 = vcmp.lt.s32.totalorder %v334, %v616
    %vm851 = vcmp.lt.s32.totalorder %v335, %v616
    %vm852 = vcmp.lt.s32.totalorder %v336, %v616
    %vm853 = vcmp.lt.s32.totalorder %v337, %v616
    %vm854 = vcmp.lt.s32.totalorder %v338, %v616
    %vm855 = vcmp.lt.s32.totalorder %v339, %v616
    %vm856 = vcmp.lt.s32.totalorder %v340, %v616
    %vm857 = vcmp.lt.s32.totalorder %v341, %v616
    %vm858 = vcmp.lt.s32.totalorder %v342, %v616
    %vm859 = vcmp.lt.s32.totalorder %v343, %v616
    %vm860 = vcmp.lt.s32.totalorder %v344, %v616
    %vm861 = vcmp.lt.s32.totalorder %v345, %v616
    %vm862 = vcmp.lt.s32.totalorder %v346, %v616
    %vm863 = vcmp.lt.s32.totalorder %v347, %v616
    %vm864 = vcmp.lt.s32.totalorder %v348, %v616
    %vm865 = vcmp.lt.s32.totalorder %v349, %v616
    %vm866 = vcmp.lt.s32.totalorder %v350, %v616
    %vm867 = vcmp.lt.s32.totalorder %v351, %v616
    %vm868 = vcmp.lt.s32.totalorder %v352, %v616
    %vm869 = vcmp.lt.s32.totalorder %v353, %v616
    %vm870 = vcmp.lt.s32.totalorder %v354, %v616
    %vm871 = vcmp.lt.s32.totalorder %v355, %v616
    %vm872 = vcmp.lt.s32.totalorder %v356, %v616
    %vm873 = vmand %vm360, %vm617
    %vm874 = vmand %vm361, %vm618
    %vm875 = vmand %vm362, %vm619
    %vm876 = vmand %vm363, %vm620
    %vm877 = vmand %vm364, %vm621
    %vm878 = vmand %vm365, %vm622
    %vm879 = vmand %vm366, %vm623
    %vm880 = vmand %vm367, %vm624
    %vm881 = vmand %vm368, %vm625
    %vm882 = vmand %vm369, %vm626
    %vm883 = vmand %vm370, %vm627
    %vm884 = vmand %vm371, %vm628
    %vm885 = vmand %vm372, %vm629
    %vm886 = vmand %vm373, %vm630
    %vm887 = vmand %vm374, %vm631
    %vm888 = vmand %vm375, %vm632
    %vm889 = vmand %vm376, %vm633
    %vm890 = vmand %vm377, %vm634
    %vm891 = vmand %vm378, %vm635
    %vm892 = vmand %vm379, %vm636
    %vm893 = vmand %vm380, %vm637
    %vm894 = vmand %vm381, %vm638
    %vm895 = vmand %vm382, %vm639
    %vm896 = vmand %vm383, %vm640
    %vm897 = vmand %vm384, %vm641
    %vm898 = vmand %vm385, %vm642
    %vm899 = vmand %vm386, %vm643
    %vm900 = vmand %vm387, %vm644
    %vm901 = vmand %vm388, %vm645
    %vm902 = vmand %vm389, %vm646
    %vm903 = vmand %vm390, %vm647
    %vm904 = vmand %vm391, %vm648
    %vm905 = vmand %vm392, %vm649
    %vm906 = vmand %vm393, %vm650
    %vm907 = vmand %vm394, %vm651
    %vm908 = vmand %vm395, %vm652
    %vm909 = vmand %vm396, %vm653
    %vm910 = vmand %vm397, %vm654
    %vm911 = vmand %vm398, %vm655
    %vm912 = vmand %vm399, %vm656
    %vm913 = vmand %vm400, %vm657
    %vm914 = vmand %vm401, %vm658
    %vm915 = vmand %vm402, %vm659
    %vm916 = vmand %vm403, %vm660
    %vm917 = vmand %vm404, %vm661
    %vm918 = vmand %vm405, %vm662
    %vm919 = vmand %vm406, %vm663
    %vm920 = vmand %vm407, %vm664
    %vm921 = vmand %vm408, %vm665
    %vm922 = vmand %vm409, %vm666
    %vm923 = vmand %vm410, %vm667
    %vm924 = vmand %vm411, %vm668
    %vm925 = vmand %vm412, %vm669
    %vm926 = vmand %vm413, %vm670
    %vm927 = vmand %vm414, %vm671
    %vm928 = vmand %vm415, %vm672
    %vm929 = vmand %vm416, %vm673
    %vm930 = vmand %vm417, %vm674
    %vm931 = vmand %vm418, %vm675
    %vm932 = vmand %vm419, %vm676
    %vm933 = vmand %vm420, %vm677
    %vm934 = vmand %vm421, %vm678
    %vm935 = vmand %vm422, %vm679
    %vm936 = vmand %vm423, %vm680
    %vm937 = vmand %vm424, %vm681
    %vm938 = vmand %vm425, %vm682
    %vm939 = vmand %vm426, %vm683
    %vm940 = vmand %vm427, %vm684
    %vm941 = vmand %vm428, %vm685
    %vm942 = vmand %vm429, %vm686
    %vm943 = vmand %vm430, %vm687
    %vm944 = vmand %vm431, %vm688
    %vm945 = vmand %vm432, %vm689
    %vm946 = vmand %vm433, %vm690
    %vm947 = vmand %vm434, %vm691
    %vm948 = vmand %vm435, %vm692
    %vm949 = vmand %vm436, %vm693
    %vm950 = vmand %vm437, %vm694
    %vm951 = vmand %vm438, %vm695
    %vm952 = vmand %vm439, %vm696
    %vm953 = vmand %vm440, %vm697
    %vm954 = vmand %vm441, %vm698
    %vm955 = vmand %vm442, %vm699
    %vm956 = vmand %vm443, %vm700
    %vm957 = vmand %vm444, %vm701
    %vm958 = vmand %vm445, %vm702
    %vm959 = vmand %vm446, %vm703
    %vm960 = vmand %vm447, %vm704
    %vm961 = vmand %vm448, %vm705
    %vm962 = vmand %vm449, %vm706
    %vm963 = vmand %vm450, %vm707
    %vm964 = vmand %vm451, %vm708
    %vm965 = vmand %vm452, %vm709
    %vm966 = vmand %vm453, %vm710
    %vm967 = vmand %vm454, %vm711
    %vm968 = vmand %vm455, %vm712
    %vm969 = vmand %vm456, %vm713
    %vm970 = vmand %vm457, %vm714
    %vm971 = vmand %vm458, %vm715
    %vm972 = vmand %vm459, %vm716
    %vm973 = vmand %vm460, %vm717
    %vm974 = vmand %vm461, %vm718
    %vm975 = vmand %vm462, %vm719
    %vm976 = vmand %vm463, %vm720
    %vm977 = vmand %vm464, %vm721
    %vm978 = vmand %vm465, %vm722
    %vm979 = vmand %vm466, %vm723
    %vm980 = vmand %vm467, %vm724
    %vm981 = vmand %vm468, %vm725
    %vm982 = vmand %vm469, %vm726
    %vm983 = vmand %vm470, %vm727
    %vm984 = vmand %vm471, %vm728
    %vm985 = vmand %vm472, %vm729
    %vm986 = vmand %vm473, %vm730
    %vm987 = vmand %vm474, %vm731
    %vm988 = vmand %vm475, %vm732
    %vm989 = vmand %vm476, %vm733
    %vm990 = vmand %vm477, %vm734
    %vm991 = vmand %vm478, %vm735
    %vm992 = vmand %vm479, %vm736
    %vm993 = vmand %vm480, %vm737
    %vm994 = vmand %vm481, %vm738
    %vm995 = vmand %vm482, %vm739
    %vm996 = vmand %vm483, %vm740
    %vm997 = vmand %vm484, %vm741
    %vm998 = vmand %vm485, %vm742
    %vm999 = vmand %vm486, %vm743
    %vm1000 = vmand %vm487, %vm744
    %vm1001 = vmand %vm488, %vm745
    %vm1002 = vmand %vm489, %vm746
    %vm1003 = vmand %vm490, %vm747
    %vm1004 = vmand %vm491, %vm748
    %vm1005 = vmand %vm492, %vm749
    %vm1006 = vmand %vm493, %vm750
    %vm1007 = vmand %vm494, %vm751
    %vm1008 = vmand %vm495, %vm752
    %vm1009 = vmand %vm496, %vm753
    %vm1010 = vmand %vm497, %vm754
    %vm1011 = vmand %vm498, %vm755
    %vm1012 = vmand %vm499, %vm756
    %vm1013 = vmand %vm500, %vm757
    %vm1014 = vmand %vm501, %vm758
    %vm1015 = vmand %vm502, %vm759
    %vm1016 = vmand %vm503, %vm760
    %vm1017 = vmand %vm504, %vm761
    %vm1018 = vmand %vm505, %vm762
    %vm1019 = vmand %vm506, %vm763
    %vm1020 = vmand %vm507, %vm764
    %vm1021 = vmand %vm508, %vm765
    %vm1022 = vmand %vm509, %vm766
    %vm1023 = vmand %vm510, %vm767
    %vm1024 = vmand %vm511, %vm768
    %vm1025 = vmand %vm512, %vm769
    %vm1026 = vmand %vm513, %vm770
    %vm1027 = vmand %vm514, %vm771
    %vm1028 = vmand %vm515, %vm772
    %vm1029 = vmand %vm516, %vm773
    %vm1030 = vmand %vm517, %vm774
    %vm1031 = vmand %vm518, %vm775
    %vm1032 = vmand %vm519, %vm776
    %vm1033 = vmand %vm520, %vm777
    %vm1034 = vmand %vm521, %vm778
    %vm1035 = vmand %vm522, %vm779
    %vm1036 = vmand %vm523, %vm780
    %vm1037 = vmand %vm524, %vm781
    %vm1038 = vmand %vm525, %vm782
    %vm1039 = vmand %vm526, %vm783
    %vm1040 = vmand %vm527, %vm784
    %vm1041 = vmand %vm528, %vm785
    %vm1042 = vmand %vm529, %vm786
    %vm1043 = vmand %vm530, %vm787
    %vm1044 = vmand %vm531, %vm788
    %vm1045 = vmand %vm532, %vm789
    %vm1046 = vmand %vm533, %vm790
    %vm1047 = vmand %vm534, %vm791
    %vm1048 = vmand %vm535, %vm792
    %vm1049 = vmand %vm536, %vm793
    %vm1050 = vmand %vm537, %vm794
    %vm1051 = vmand %vm538, %vm795
    %vm1052 = vmand %vm539, %vm796
    %vm1053 = vmand %vm540, %vm797
    %vm1054 = vmand %vm541, %vm798
    %vm1055 = vmand %vm542, %vm799
    %vm1056 = vmand %vm543, %vm800
    %vm1057 = vmand %vm544, %vm801
    %vm1058 = vmand %vm545, %vm802
    %vm1059 = vmand %vm546, %vm803
    %vm1060 = vmand %vm547, %vm804
    %vm1061 = vmand %vm548, %vm805
    %vm1062 = vmand %vm549, %vm806
    %vm1063 = vmand %vm550, %vm807
    %vm1064 = vmand %vm551, %vm808
    %vm1065 = vmand %vm552, %vm809
    %vm1066 = vmand %vm553, %vm810
    %vm1067 = vmand %vm554, %vm811
    %vm1068 = vmand %vm555, %vm812
    %vm1069 = vmand %vm556, %vm813
    %vm1070 = vmand %vm557, %vm814
    %vm1071 = vmand %vm558, %vm815
    %vm1072 = vmand %vm559, %vm816
    %vm1073 = vmand %vm560, %vm817
    %vm1074 = vmand %vm561, %vm818
    %vm1075 = vmand %vm562, %vm819
    %vm1076 = vmand %vm563, %vm820
    %vm1077 = vmand %vm564, %vm821
    %vm1078 = vmand %vm565, %vm822
    %vm1079 = vmand %vm566, %vm823
    %vm1080 = vmand %vm567, %vm824
    %vm1081 = vmand %vm568, %vm825
    %vm1082 = vmand %vm569, %vm826
    %vm1083 = vmand %vm570, %vm827
    %vm1084 = vmand %vm571, %vm828
    %vm1085 = vmand %vm572, %vm829
    %vm1086 = vmand %vm573, %vm830
    %vm1087 = vmand %vm574, %vm831
    %vm1088 = vmand %vm575, %vm832
    %vm1089 = vmand %vm576, %vm833
    %vm1090 = vmand %vm577, %vm834
    %vm1091 = vmand %vm578, %vm835
    %vm1092 = vmand %vm579, %vm836
    %vm1093 = vmand %vm580, %vm837
    %vm1094 = vmand %vm581, %vm838
    %vm1095 = vmand %vm582, %vm839
    %vm1096 = vmand %vm583, %vm840
    %vm1097 = vmand %vm584, %vm841
    %vm1098 = vmand %vm585, %vm842
    %vm1099 = vmand %vm586, %vm843
    %vm1100 = vmand %vm587, %vm844
    %vm1101 = vmand %vm588, %vm845
    %vm1102 = vmand %vm589, %vm846
    %vm1103 = vmand %vm590, %vm847
    %vm1104 = vmand %vm591, %vm848
    %vm1105 = vmand %vm592, %vm849
    %vm1106 = vmand %vm593, %vm850
    %vm1107 = vmand %vm594, %vm851
    %vm1108 = vmand %vm595, %vm852
    %vm1109 = vmand %vm596, %vm853
    %vm1110 = vmand %vm597, %vm854
    %vm1111 = vmand %vm598, %vm855
    %vm1112 = vmand %vm599, %vm856
    %vm1113 = vmand %vm600, %vm857
    %vm1114 = vmand %vm601, %vm858
    %vm1115 = vmand %vm602, %vm859
    %vm1116 = vmand %vm603, %vm860
    %vm1117 = vmand %vm604, %vm861
    %vm1118 = vmand %vm605, %vm862
    %vm1119 = vmand %vm606, %vm863
    %vm1120 = vmand %vm607, %vm864
    %vm1121 = vmand %vm608, %vm865
    %vm1122 = vmand %vm609, %vm866
    %vm1123 = vmand %vm610, %vm867
    %vm1124 = vmand %vm611, %vm868
    %vm1125 = vmand %vm612, %vm869
    %vm1126 = vmand %vm613, %vm870
    %vm1127 = vmand %vm614, %vm871
    %vm1128 = vmand %vm615, %vm872
    %v1129 = vsel %vm873, 1, 0
    %v1130 = vsel %vm874, 1, 0
    %v1131 = vsel %vm875, 1, 0
    %v1132 = vsel %vm876, 1, 0
    %v1133 = vsel %vm877, 1, 0
    %v1134 = vsel %vm878, 1, 0
    %v1135 = vsel %vm879, 1, 0
    %v1136 = vsel %vm880, 1, 0
    %v1137 = vsel %vm881, 1, 0
    %v1138 = vsel %vm882, 1, 0
    %v1139 = vsel %vm883, 1, 0
    %v1140 = vsel %vm884, 1, 0
    %v1141 = vsel %vm885, 1, 0
    %v1142 = vsel %vm886, 1, 0
    %v1143 = vsel %vm887, 1, 0
    %v1144 = vsel %vm888, 1, 0
    %v1145 = vsel %vm889, 1, 0
    %v1146 = vsel %vm890, 1, 0
    %v1147 = vsel %vm891, 1, 0
    %v1148 = vsel %vm892, 1, 0
    %v1149 = vsel %vm893, 1, 0
    %v1150 = vsel %vm894, 1, 0
    %v1151 = vsel %vm895, 1, 0
    %v1152 = vsel %vm896, 1, 0
    %v1153 = vsel %vm897, 1, 0
    %v1154 = vsel %vm898, 1, 0
    %v1155 = vsel %vm899, 1, 0
    %v1156 = vsel %vm900, 1, 0
    %v1157 = vsel %vm901, 1, 0
    %v1158 = vsel %vm902, 1, 0
    %v1159 = vsel %vm903, 1, 0
    %v1160 = vsel %vm904, 1, 0
    %v1161 = vsel %vm905, 1, 0
    %v1162 = vsel %vm906, 1, 0
    %v1163 = vsel %vm907, 1, 0
    %v1164 = vsel %vm908, 1, 0
    %v1165 = vsel %vm909, 1, 0
    %v1166 = vsel %vm910, 1, 0
    %v1167 = vsel %vm911, 1, 0
    %v1168 = vsel %vm912, 1, 0
    %v1169 = vsel %vm913, 1, 0
    %v1170 = vsel %vm914, 1, 0
    %v1171 = vsel %vm915, 1, 0
    %v1172 = vsel %vm916, 1, 0
    %v1173 = vsel %vm917, 1, 0
    %v1174 = vsel %vm918, 1, 0
    %v1175 = vsel %vm919, 1, 0
    %v1176 = vsel %vm920, 1, 0
    %v1177 = vsel %vm921, 1, 0
    %v1178 = vsel %vm922, 1, 0
    %v1179 = vsel %vm923, 1, 0
    %v1180 = vsel %vm924, 1, 0
    %v1181 = vsel %vm925, 1, 0
    %v1182 = vsel %vm926, 1, 0
    %v1183 = vsel %vm927, 1, 0
    %v1184 = vsel %vm928, 1, 0
    %v1185 = vsel %vm929, 1, 0
    %v1186 = vsel %vm930, 1, 0
    %v1187 = vsel %vm931, 1, 0
    %v1188 = vsel %vm932, 1, 0
    %v1189 = vsel %vm933, 1, 0
    %v1190 = vsel %vm934, 1, 0
    %v1191 = vsel %vm935, 1, 0
    %v1192 = vsel %vm936, 1, 0
    %v1193 = vsel %vm937, 1, 0
    %v1194 = vsel %vm938, 1, 0
    %v1195 = vsel %vm939, 1, 0
    %v1196 = vsel %vm940, 1, 0
    %v1197 = vsel %vm941, 1, 0
    %v1198 = vsel %vm942, 1, 0
    %v1199 = vsel %vm943, 1, 0
    %v1200 = vsel %vm944, 1, 0
    %v1201 = vsel %vm945, 1, 0
    %v1202 = vsel %vm946, 1, 0
    %v1203 = vsel %vm947, 1, 0
    %v1204 = vsel %vm948, 1, 0
    %v1205 = vsel %vm949, 1, 0
    %v1206 = vsel %vm950, 1, 0
    %v1207 = vsel %vm951, 1, 0
    %v1208 = vsel %vm952, 1, 0
    %v1209 = vsel %vm953, 1, 0
    %v1210 = vsel %vm954, 1, 0
    %v1211 = vsel %vm955, 1, 0
    %v1212 = vsel %vm956, 1, 0
    %v1213 = vsel %vm957, 1, 0
    %v1214 = vsel %vm958, 1, 0
    %v1215 = vsel %vm959, 1, 0
    %v1216 = vsel %vm960, 1, 0
    %v1217 = vsel %vm961, 1, 0
    %v1218 = vsel %vm962, 1, 0
    %v1219 = vsel %vm963, 1, 0
    %v1220 = vsel %vm964, 1, 0
    %v1221 = vsel %vm965, 1, 0
    %v1222 = vsel %vm966, 1, 0
    %v1223 = vsel %vm967, 1, 0
    %v1224 = vsel %vm968, 1, 0
    %v1225 = vsel %vm969, 1, 0
    %v1226 = vsel %vm970, 1, 0
    %v1227 = vsel %vm971, 1, 0
    %v1228 = vsel %vm972, 1, 0
    %v1229 = vsel %vm973, 1, 0
    %v1230 = vsel %vm974, 1, 0
    %v1231 = vsel %vm975, 1, 0
    %v1232 = vsel %vm976, 1, 0
    %v1233 = vsel %vm977, 1, 0
    %v1234 = vsel %vm978, 1, 0
    %v1235 = vsel %vm979, 1, 0
    %v1236 = vsel %vm980, 1, 0
    %v1237 = vsel %vm981, 1, 0
    %v1238 = vsel %vm982, 1, 0
    %v1239 = vsel %vm983, 1, 0
    %v1240 = vsel %vm984, 1, 0
    %v1241 = vsel %vm985, 1, 0
    %v1242 = vsel %vm986, 1, 0
    %v1243 = vsel %vm987, 1, 0
    %v1244 = vsel %vm988, 1, 0
    %v1245 = vsel %vm989, 1, 0
    %v1246 = vsel %vm990, 1, 0
    %v1247 = vsel %vm991, 1, 0
    %v1248 = vsel %vm992, 1, 0
    %v1249 = vsel %vm993, 1, 0
    %v1250 = vsel %vm994, 1, 0
    %v1251 = vsel %vm995, 1, 0
    %v1252 = vsel %vm996, 1, 0
    %v1253 = vsel %vm997, 1, 0
    %v1254 = vsel %vm998, 1, 0
    %v1255 = vsel %vm999, 1, 0
    %v1256 = vsel %vm1000, 1, 0
    %v1257 = vsel %vm1001, 1, 0
    %v1258 = vsel %vm1002, 1, 0
    %v1259 = vsel %vm1003, 1, 0
    %v1260 = vsel %vm1004, 1, 0
    %v1261 = vsel %vm1005, 1, 0
    %v1262 = vsel %vm1006, 1, 0
    %v1263 = vsel %vm1007, 1, 0
    %v1264 = vsel %vm1008, 1, 0
    %v1265 = vsel %vm1009, 1, 0
    %v1266 = vsel %vm1010, 1, 0
    %v1267 = vsel %vm1011, 1, 0
    %v1268 = vsel %vm1012, 1, 0
    %v1269 = vsel %vm1013, 1, 0
    %v1270 = vsel %vm1014, 1, 0
    %v1271 = vsel %vm1015, 1, 0
    %v1272 = vsel %vm1016, 1, 0
    %v1273 = vsel %vm1017, 1, 0
    %v1274 = vsel %vm1018, 1, 0
    %v1275 = vsel %vm1019, 1, 0
    %v1276 = vsel %vm1020, 1, 0
    %v1277 = vsel %vm1021, 1, 0
    %v1278 = vsel %vm1022, 1, 0
    %v1279 = vsel %vm1023, 1, 0
    %v1280 = vsel %vm1024, 1, 0
    %v1281 = vsel %vm1025, 1, 0
    %v1282 = vsel %vm1026, 1, 0
    %v1283 = vsel %vm1027, 1, 0
    %v1284 = vsel %vm1028, 1, 0
    %v1285 = vsel %vm1029, 1, 0
    %v1286 = vsel %vm1030, 1, 0
    %v1287 = vsel %vm1031, 1, 0
    %v1288 = vsel %vm1032, 1, 0
    %v1289 = vsel %vm1033, 1, 0
    %v1290 = vsel %vm1034, 1, 0
    %v1291 = vsel %vm1035, 1, 0
    %v1292 = vsel %vm1036, 1, 0
    %v1293 = vsel %vm1037, 1, 0
    %v1294 = vsel %vm1038, 1, 0
    %v1295 = vsel %vm1039, 1, 0
    %v1296 = vsel %vm1040, 1, 0
    %v1297 = vsel %vm1041, 1, 0
    %v1298 = vsel %vm1042, 1, 0
    %v1299 = vsel %vm1043, 1, 0
    %v1300 = vsel %vm1044, 1, 0
    %v1301 = vsel %vm1045, 1, 0
    %v1302 = vsel %vm1046, 1, 0
    %v1303 = vsel %vm1047, 1, 0
    %v1304 = vsel %vm1048, 1, 0
    %v1305 = vsel %vm1049, 1, 0
    %v1306 = vsel %vm1050, 1, 0
    %v1307 = vsel %vm1051, 1, 0
    %v1308 = vsel %vm1052, 1, 0
    %v1309 = vsel %vm1053, 1, 0
    %v1310 = vsel %vm1054, 1, 0
    %v1311 = vsel %vm1055, 1, 0
    %v1312 = vsel %vm1056, 1, 0
    %v1313 = vsel %vm1057, 1, 0
    %v1314 = vsel %vm1058, 1, 0
    %v1315 = vsel %vm1059, 1, 0
    %v1316 = vsel %vm1060, 1, 0
    %v1317 = vsel %vm1061, 1, 0
    %v1318 = vsel %vm1062, 1, 0
    %v1319 = vsel %vm1063, 1, 0
    %v1320 = vsel %vm1064, 1, 0
    %v1321 = vsel %vm1065, 1, 0
    %v1322 = vsel %vm1066, 1, 0
    %v1323 = vsel %vm1067, 1, 0
    %v1324 = vsel %vm1068, 1, 0
    %v1325 = vsel %vm1069, 1, 0
    %v1326 = vsel %vm1070, 1, 0
    %v1327 = vsel %vm1071, 1, 0
    %v1328 = vsel %vm1072, 1, 0
    %v1329 = vsel %vm1073, 1, 0
    %v1330 = vsel %vm1074, 1, 0
    %v1331 = vsel %vm1075, 1, 0
    %v1332 = vsel %vm1076, 1, 0
    %v1333 = vsel %vm1077, 1, 0
    %v1334 = vsel %vm1078, 1, 0
    %v1335 = vsel %vm1079, 1, 0
    %v1336 = vsel %vm1080, 1, 0
    %v1337 = vsel %vm1081, 1, 0
    %v1338 = vsel %vm1082, 1, 0
    %v1339 = vsel %vm1083, 1, 0
    %v1340 = vsel %vm1084, 1, 0
    %v1341 = vsel %vm1085, 1, 0
    %v1342 = vsel %vm1086, 1, 0
    %v1343 = vsel %vm1087, 1, 0
    %v1344 = vsel %vm1088, 1, 0
    %v1345 = vsel %vm1089, 1, 0
    %v1346 = vsel %vm1090, 1, 0
    %v1347 = vsel %vm1091, 1, 0
    %v1348 = vsel %vm1092, 1, 0
    %v1349 = vsel %vm1093, 1, 0
    %v1350 = vsel %vm1094, 1, 0
    %v1351 = vsel %vm1095, 1, 0
    %v1352 = vsel %vm1096, 1, 0
    %v1353 = vsel %vm1097, 1, 0
    %v1354 = vsel %vm1098, 1, 0
    %v1355 = vsel %vm1099, 1, 0
    %v1356 = vsel %vm1100, 1, 0
    %v1357 = vsel %vm1101, 1, 0
    %v1358 = vsel %vm1102, 1, 0
    %v1359 = vsel %vm1103, 1, 0
    %v1360 = vsel %vm1104, 1, 0
    %v1361 = vsel %vm1105, 1, 0
    %v1362 = vsel %vm1106, 1, 0
    %v1363 = vsel %vm1107, 1, 0
    %v1364 = vsel %vm1108, 1, 0
    %v1365 = vsel %vm1109, 1, 0
    %v1366 = vsel %vm1110, 1, 0
    %v1367 = vsel %vm1111, 1, 0
    %v1368 = vsel %vm1112, 1, 0
    %v1369 = vsel %vm1113, 1, 0
    %v1370 = vsel %vm1114, 1, 0
    %v1371 = vsel %vm1115, 1, 0
    %v1372 = vsel %vm1116, 1, 0
    %v1373 = vsel %vm1117, 1, 0
    %v1374 = vsel %vm1118, 1, 0
    %v1375 = vsel %vm1119, 1, 0
    %v1376 = vsel %vm1120, 1, 0
    %v1377 = vsel %vm1121, 1, 0
    %v1378 = vsel %vm1122, 1, 0
    %v1379 = vsel %vm1123, 1, 0
    %v1380 = vsel %vm1124, 1, 0
    %v1381 = vsel %vm1125, 1, 0
    %v1382 = vsel %vm1126, 1, 0
    %v1383 = vsel %vm1127, 1, 0
    %v1384 = vsel %vm1128, 1, 0
    %v1385 = vcvt.s32.f32 %v1129
    %v1386 = vcvt.s32.f32 %v1130
    %v1387 = vcvt.s32.f32 %v1131
    %v1388 = vcvt.s32.f32 %v1132
    %v1389 = vcvt.s32.f32 %v1133
    %v1390 = vcvt.s32.f32 %v1134
    %v1391 = vcvt.s32.f32 %v1135
    %v1392 = vcvt.s32.f32 %v1136
    %v1393 = vcvt.s32.f32 %v1137
    %v1394 = vcvt.s32.f32 %v1138
    %v1395 = vcvt.s32.f32 %v1139
    %v1396 = vcvt.s32.f32 %v1140
    %v1397 = vcvt.s32.f32 %v1141
    %v1398 = vcvt.s32.f32 %v1142
    %v1399 = vcvt.s32.f32 %v1143
    %v1400 = vcvt.s32.f32 %v1144
    %v1401 = vcvt.s32.f32 %v1145
    %v1402 = vcvt.s32.f32 %v1146
    %v1403 = vcvt.s32.f32 %v1147
    %v1404 = vcvt.s32.f32 %v1148
    %v1405 = vcvt.s32.f32 %v1149
    %v1406 = vcvt.s32.f32 %v1150
    %v1407 = vcvt.s32.f32 %v1151
    %v1408 = vcvt.s32.f32 %v1152
    %v1409 = vcvt.s32.f32 %v1153
    %v1410 = vcvt.s32.f32 %v1154
    %v1411 = vcvt.s32.f32 %v1155
    %v1412 = vcvt.s32.f32 %v1156
    %v1413 = vcvt.s32.f32 %v1157
    %v1414 = vcvt.s32.f32 %v1158
    %v1415 = vcvt.s32.f32 %v1159
    %v1416 = vcvt.s32.f32 %v1160
    %v1417 = vcvt.s32.f32 %v1161
    %v1418 = vcvt.s32.f32 %v1162
    %v1419 = vcvt.s32.f32 %v1163
    %v1420 = vcvt.s32.f32 %v1164
    %v1421 = vcvt.s32.f32 %v1165
    %v1422 = vcvt.s32.f32 %v1166
    %v1423 = vcvt.s32.f32 %v1167
    %v1424 = vcvt.s32.f32 %v1168
    %v1425 = vcvt.s32.f32 %v1169
    %v1426 = vcvt.s32.f32 %v1170
    %v1427 = vcvt.s32.f32 %v1171
    %v1428 = vcvt.s32.f32 %v1172
    %v1429 = vcvt.s32.f32 %v1173
    %v1430 = vcvt.s32.f32 %v1174
    %v1431 = vcvt.s32.f32 %v1175
    %v1432 = vcvt.s32.f32 %v1176
    %v1433 = vcvt.s32.f32 %v1177
    %v1434 = vcvt.s32.f32 %v1178
    %v1435 = vcvt.s32.f32 %v1179
    %v1436 = vcvt.s32.f32 %v1180
    %v1437 = vcvt.s32.f32 %v1181
    %v1438 = vcvt.s32.f32 %v1182
    %v1439 = vcvt.s32.f32 %v1183
    %v1440 = vcvt.s32.f32 %v1184
    %v1441 = vcvt.s32.f32 %v1185
    %v1442 = vcvt.s32.f32 %v1186
    %v1443 = vcvt.s32.f32 %v1187
    %v1444 = vcvt.s32.f32 %v1188
    %v1445 = vcvt.s32.f32 %v1189
    %v1446 = vcvt.s32.f32 %v1190
    %v1447 = vcvt.s32.f32 %v1191
    %v1448 = vcvt.s32.f32 %v1192
    %v1449 = vcvt.s32.f32 %v1193
    %v1450 = vcvt.s32.f32 %v1194
    %v1451 = vcvt.s32.f32 %v1195
    %v1452 = vcvt.s32.f32 %v1196
    %v1453 = vcvt.s32.f32 %v1197
    %v1454 = vcvt.s32.f32 %v1198
    %v1455 = vcvt.s32.f32 %v1199
    %v1456 = vcvt.s32.f32 %v1200
    %v1457 = vcvt.s32.f32 %v1201
    %v1458 = vcvt.s32.f32 %v1202
    %v1459 = vcvt.s32.f32 %v1203
    %v1460 = vcvt.s32.f32 %v1204
    %v1461 = vcvt.s32.f32 %v1205
    %v1462 = vcvt.s32.f32 %v1206
    %v1463 = vcvt.s32.f32 %v1207
    %v1464 = vcvt.s32.f32 %v1208
    %v1465 = vcvt.s32.f32 %v1209
    %v1466 = vcvt.s32.f32 %v1210
    %v1467 = vcvt.s32.f32 %v1211
    %v1468 = vcvt.s32.f32 %v1212
    %v1469 = vcvt.s32.f32 %v1213
    %v1470 = vcvt.s32.f32 %v1214
    %v1471 = vcvt.s32.f32 %v1215
    %v1472 = vcvt.s32.f32 %v1216
    %v1473 = vcvt.s32.f32 %v1217
    %v1474 = vcvt.s32.f32 %v1218
    %v1475 = vcvt.s32.f32 %v1219
    %v1476 = vcvt.s32.f32 %v1220
    %v1477 = vcvt.s32.f32 %v1221
    %v1478 = vcvt.s32.f32 %v1222
    %v1479 = vcvt.s32.f32 %v1223
    %v1480 = vcvt.s32.f32 %v1224
    %v1481 = vcvt.s32.f32 %v1225
    %v1482 = vcvt.s32.f32 %v1226
    %v1483 = vcvt.s32.f32 %v1227
    %v1484 = vcvt.s32.f32 %v1228
    %v1485 = vcvt.s32.f32 %v1229
    %v1486 = vcvt.s32.f32 %v1230
    %v1487 = vcvt.s32.f32 %v1231
    %v1488 = vcvt.s32.f32 %v1232
    %v1489 = vcvt.s32.f32 %v1233
    %v1490 = vcvt.s32.f32 %v1234
    %v1491 = vcvt.s32.f32 %v1235
    %v1492 = vcvt.s32.f32 %v1236
    %v1493 = vcvt.s32.f32 %v1237
    %v1494 = vcvt.s32.f32 %v1238
    %v1495 = vcvt.s32.f32 %v1239
    %v1496 = vcvt.s32.f32 %v1240
    %v1497 = vcvt.s32.f32 %v1241
    %v1498 = vcvt.s32.f32 %v1242
    %v1499 = vcvt.s32.f32 %v1243
    %v1500 = vcvt.s32.f32 %v1244
    %v1501 = vcvt.s32.f32 %v1245
    %v1502 = vcvt.s32.f32 %v1246
    %v1503 = vcvt.s32.f32 %v1247
    %v1504 = vcvt.s32.f32 %v1248
    %v1505 = vcvt.s32.f32 %v1249
    %v1506 = vcvt.s32.f32 %v1250
    %v1507 = vcvt.s32.f32 %v1251
    %v1508 = vcvt.s32.f32 %v1252
    %v1509 = vcvt.s32.f32 %v1253
    %v1510 = vcvt.s32.f32 %v1254
    %v1511 = vcvt.s32.f32 %v1255
    %v1512 = vcvt.s32.f32 %v1256
    %v1513 = vcvt.s32.f32 %v1257
    %v1514 = vcvt.s32.f32 %v1258
    %v1515 = vcvt.s32.f32 %v1259
    %v1516 = vcvt.s32.f32 %v1260
    %v1517 = vcvt.s32.f32 %v1261
    %v1518 = vcvt.s32.f32 %v1262
    %v1519 = vcvt.s32.f32 %v1263
    %v1520 = vcvt.s32.f32 %v1264
    %v1521 = vcvt.s32.f32 %v1265
    %v1522 = vcvt.s32.f32 %v1266
    %v1523 = vcvt.s32.f32 %v1267
    %v1524 = vcvt.s32.f32 %v1268
    %v1525 = vcvt.s32.f32 %v1269
    %v1526 = vcvt.s32.f32 %v1270
    %v1527 = vcvt.s32.f32 %v1271
    %v1528 = vcvt.s32.f32 %v1272
    %v1529 = vcvt.s32.f32 %v1273
    %v1530 = vcvt.s32.f32 %v1274
    %v1531 = vcvt.s32.f32 %v1275
    %v1532 = vcvt.s32.f32 %v1276
    %v1533 = vcvt.s32.f32 %v1277
    %v1534 = vcvt.s32.f32 %v1278
    %v1535 = vcvt.s32.f32 %v1279
    %v1536 = vcvt.s32.f32 %v1280
    %v1537 = vcvt.s32.f32 %v1281
    %v1538 = vcvt.s32.f32 %v1282
    %v1539 = vcvt.s32.f32 %v1283
    %v1540 = vcvt.s32.f32 %v1284
    %v1541 = vcvt.s32.f32 %v1285
    %v1542 = vcvt.s32.f32 %v1286
    %v1543 = vcvt.s32.f32 %v1287
    %v1544 = vcvt.s32.f32 %v1288
    %v1545 = vcvt.s32.f32 %v1289
    %v1546 = vcvt.s32.f32 %v1290
    %v1547 = vcvt.s32.f32 %v1291
    %v1548 = vcvt.s32.f32 %v1292
    %v1549 = vcvt.s32.f32 %v1293
    %v1550 = vcvt.s32.f32 %v1294
    %v1551 = vcvt.s32.f32 %v1295
    %v1552 = vcvt.s32.f32 %v1296
    %v1553 = vcvt.s32.f32 %v1297
    %v1554 = vcvt.s32.f32 %v1298
    %v1555 = vcvt.s32.f32 %v1299
    %v1556 = vcvt.s32.f32 %v1300
    %v1557 = vcvt.s32.f32 %v1301
    %v1558 = vcvt.s32.f32 %v1302
    %v1559 = vcvt.s32.f32 %v1303
    %v1560 = vcvt.s32.f32 %v1304
    %v1561 = vcvt.s32.f32 %v1305
    %v1562 = vcvt.s32.f32 %v1306
    %v1563 = vcvt.s32.f32 %v1307
    %v1564 = vcvt.s32.f32 %v1308
    %v1565 = vcvt.s32.f32 %v1309
    %v1566 = vcvt.s32.f32 %v1310
    %v1567 = vcvt.s32.f32 %v1311
    %v1568 = vcvt.s32.f32 %v1312
    %v1569 = vcvt.s32.f32 %v1313
    %v1570 = vcvt.s32.f32 %v1314
    %v1571 = vcvt.s32.f32 %v1315
    %v1572 = vcvt.s32.f32 %v1316
    %v1573 = vcvt.s32.f32 %v1317
    %v1574 = vcvt.s32.f32 %v1318
    %v1575 = vcvt.s32.f32 %v1319
    %v1576 = vcvt.s32.f32 %v1320
    %v1577 = vcvt.s32.f32 %v1321
    %v1578 = vcvt.s32.f32 %v1322
    %v1579 = vcvt.s32.f32 %v1323
    %v1580 = vcvt.s32.f32 %v1324
    %v1581 = vcvt.s32.f32 %v1325
    %v1582 = vcvt.s32.f32 %v1326
    %v1583 = vcvt.s32.f32 %v1327
    %v1584 = vcvt.s32.f32 %v1328
    %v1585 = vcvt.s32.f32 %v1329
    %v1586 = vcvt.s32.f32 %v1330
    %v1587 = vcvt.s32.f32 %v1331
    %v1588 = vcvt.s32.f32 %v1332
    %v1589 = vcvt.s32.f32 %v1333
    %v1590 = vcvt.s32.f32 %v1334
    %v1591 = vcvt.s32.f32 %v1335
    %v1592 = vcvt.s32.f32 %v1336
    %v1593 = vcvt.s32.f32 %v1337
    %v1594 = vcvt.s32.f32 %v1338
    %v1595 = vcvt.s32.f32 %v1339
    %v1596 = vcvt.s32.f32 %v1340
    %v1597 = vcvt.s32.f32 %v1341
    %v1598 = vcvt.s32.f32 %v1342
    %v1599 = vcvt.s32.f32 %v1343
    %v1600 = vcvt.s32.f32 %v1344
    %v1601 = vcvt.s32.f32 %v1345
    %v1602 = vcvt.s32.f32 %v1346
    %v1603 = vcvt.s32.f32 %v1347
    %v1604 = vcvt.s32.f32 %v1348
    %v1605 = vcvt.s32.f32 %v1349
    %v1606 = vcvt.s32.f32 %v1350
    %v1607 = vcvt.s32.f32 %v1351
    %v1608 = vcvt.s32.f32 %v1352
    %v1609 = vcvt.s32.f32 %v1353
    %v1610 = vcvt.s32.f32 %v1354
    %v1611 = vcvt.s32.f32 %v1355
    %v1612 = vcvt.s32.f32 %v1356
    %v1613 = vcvt.s32.f32 %v1357
    %v1614 = vcvt.s32.f32 %v1358
    %v1615 = vcvt.s32.f32 %v1359
    %v1616 = vcvt.s32.f32 %v1360
    %v1617 = vcvt.s32.f32 %v1361
    %v1618 = vcvt.s32.f32 %v1362
    %v1619 = vcvt.s32.f32 %v1363
    %v1620 = vcvt.s32.f32 %v1364
    %v1621 = vcvt.s32.f32 %v1365
    %v1622 = vcvt.s32.f32 %v1366
    %v1623 = vcvt.s32.f32 %v1367
    %v1624 = vcvt.s32.f32 %v1368
    %v1625 = vcvt.s32.f32 %v1369
    %v1626 = vcvt.s32.f32 %v1370
    %v1627 = vcvt.s32.f32 %v1371
    %v1628 = vcvt.s32.f32 %v1372
    %v1629 = vcvt.s32.f32 %v1373
    %v1630 = vcvt.s32.f32 %v1374
    %v1631 = vcvt.s32.f32 %v1375
    %v1632 = vcvt.s32.f32 %v1376
    %v1633 = vcvt.s32.f32 %v1377
    %v1634 = vcvt.s32.f32 %v1378
    %v1635 = vcvt.s32.f32 %v1379
    %v1636 = vcvt.s32.f32 %v1380
    %v1637 = vcvt.s32.f32 %v1381
    %v1638 = vcvt.s32.f32 %v1382
    %v1639 = vcvt.s32.f32 %v1383
    %v1640 = vcvt.s32.f32 %v1384
    %1641 = vmatprep.subr.mxu0 0.0
    %1642 = vmatpush1.msra.mxu0 %v1385
    %1643 = vmatprep.subr.mxu0 0.0
    %1644 = vmatpush1.msra.mxu0 %v1386
    %1645 = vmatprep.subr.mxu0 0.0
    %1646 = vmatpush1.msra.mxu0 %v1387
    %1647 = vmatprep.subr.mxu0 0.0
    %1648 = vmatpush1.msra.mxu0 %v1388
    %1649 = vmatprep.subr.mxu0 0.0
    %1650 = vmatpush1.msra.mxu0 %v1389
    %1651 = vmatprep.subr.mxu0 0.0
    %1652 = vmatpush1.msra.mxu0 %v1390
    %1653 = vmatprep.subr.mxu0 0.0
    %1654 = vmatpush1.msra.mxu0 %v1391
    %1655 = vmatprep.subr.mxu0 0.0
    %1656 = vmatpush1.msra.mxu0 %v1392
    %1657 = vmatprep.subr.mxu0 0.0
    %1658 = vmatpush1.msra.mxu0 %v1393
    %1659 = vmatprep.subr.mxu0 0.0
    %1660 = vmatpush1.msra.mxu0 %v1394
    %1661 = vmatprep.subr.mxu0 0.0
    %1662 = vmatpush1.msra.mxu0 %v1395
    %1663 = vmatprep.subr.mxu0 0.0
    %1664 = vmatpush1.msra.mxu0 %v1396
    %1665 = vmatprep.subr.mxu0 0.0
    %1666 = vmatpush1.msra.mxu0 %v1397
    %1667 = vmatprep.subr.mxu0 0.0
    %1668 = vmatpush1.msra.mxu0 %v1398
    %1669 = vmatprep.subr.mxu0 0.0
    %1670 = vmatpush1.msra.mxu0 %v1399
    %1671 = vmatprep.subr.mxu0 0.0
    %1672 = vmatpush1.msra.mxu0 %v1400
    %1673 = vmatprep.subr.mxu0 0.0
    %1674 = vmatpush1.msra.mxu0 %v1401
    %1675 = vmatprep.subr.mxu0 0.0
    %1676 = vmatpush1.msra.mxu0 %v1402
    %1677 = vmatprep.subr.mxu0 0.0
    %1678 = vmatpush1.msra.mxu0 %v1403
    %1679 = vmatprep.subr.mxu0 0.0
    %1680 = vmatpush1.msra.mxu0 %v1404
    %1681 = vmatprep.subr.mxu0 0.0
    %1682 = vmatpush1.msra.mxu0 %v1405
    %1683 = vmatprep.subr.mxu0 0.0
    %1684 = vmatpush1.msra.mxu0 %v1406
    %1685 = vmatprep.subr.mxu0 0.0
    %1686 = vmatpush1.msra.mxu0 %v1407
    %1687 = vmatprep.subr.mxu0 0.0
    %1688 = vmatpush1.msra.mxu0 %v1408
    %1689 = vmatprep.subr.mxu0 0.0
    %1690 = vmatpush1.msra.mxu0 %v1409
    %1691 = vmatprep.subr.mxu0 0.0
    %1692 = vmatpush1.msra.mxu0 %v1410
    %1693 = vmatprep.subr.mxu0 0.0
    %1694 = vmatpush1.msra.mxu0 %v1411
    %1695 = vmatprep.subr.mxu0 0.0
    %1696 = vmatpush1.msra.mxu0 %v1412
    %1697 = vmatprep.subr.mxu0 0.0
    %1698 = vmatpush1.msra.mxu0 %v1413
    %1699 = vmatprep.subr.mxu0 0.0
    %1700 = vmatpush1.msra.mxu0 %v1414
    %1701 = vmatprep.subr.mxu0 0.0
    %1702 = vmatpush1.msra.mxu0 %v1415
    %1703 = vmatprep.subr.mxu0 0.0
    %1704 = vmatpush1.msra.mxu0 %v1416
    %1705 = vmatprep.mubr.f32.mxu0 %v85
    %1706 = vmatmul.mubr.f32.gmra.mrb[0].mxu0 %v84
    %v1707 = vpop.f32.mrb[0].mxu0
    %v1708 = vadd.f32 0.0, %v1707
    %v1709 = vpop.f32.mrb[0].mxu0
    %1710 = vdwg.mxu0
    %1711 = vmatprep.subr.mxu0 0.0
    %1712 = vmatpush1.msra.mxu0 %v1417
    %1713 = vmatprep.subr.mxu0 0.0
    %1714 = vmatpush1.msra.mxu0 %v1418
    %1715 = vmatprep.subr.mxu0 0.0
    %1716 = vmatpush1.msra.mxu0 %v1419
    %1717 = vmatprep.subr.mxu0 0.0
    %1718 = vmatpush1.msra.mxu0 %v1420
    %1719 = vmatprep.subr.mxu0 0.0
    %1720 = vmatpush1.msra.mxu0 %v1421
    %1721 = vmatprep.subr.mxu0 0.0
    %1722 = vmatpush1.msra.mxu0 %v1422
    %1723 = vmatprep.subr.mxu0 0.0
    %1724 = vmatpush1.msra.mxu0 %v1423
    %1725 = vmatprep.subr.mxu0 0.0
    %1726 = vmatpush1.msra.mxu0 %v1424
    %1727 = vmatprep.subr.mxu0 0.0
    %1728 = vmatpush1.msra.mxu0 %v1425
    %1729 = vmatprep.subr.mxu0 0.0
    %1730 = vmatpush1.msra.mxu0 %v1426
    %1731 = vmatprep.subr.mxu0 0.0
    %1732 = vmatpush1.msra.mxu0 %v1427
    %1733 = vmatprep.subr.mxu0 0.0
    %1734 = vmatpush1.msra.mxu0 %v1428
    %1735 = vmatprep.subr.mxu0 0.0
    %1736 = vmatpush1.msra.mxu0 %v1429
    %1737 = vmatprep.subr.mxu0 0.0
    %1738 = vmatpush1.msra.mxu0 %v1430
    %1739 = vmatprep.subr.mxu0 0.0
    %1740 = vmatpush1.msra.mxu0 %v1431
    %1741 = vmatprep.subr.mxu0 0.0
    %1742 = vmatpush1.msra.mxu0 %v1432
    %1743 = vmatprep.subr.mxu0 0.0
    %1744 = vmatpush1.msra.mxu0 %v1433
    %1745 = vmatprep.subr.mxu0 0.0
    %1746 = vmatpush1.msra.mxu0 %v1434
    %1747 = vmatprep.subr.mxu0 0.0
    %1748 = vmatpush1.msra.mxu0 %v1435
    %1749 = vmatprep.subr.mxu0 0.0
    %1750 = vmatpush1.msra.mxu0 %v1436
    %1751 = vmatprep.subr.mxu0 0.0
    %1752 = vmatpush1.msra.mxu0 %v1437
    %1753 = vmatprep.subr.mxu0 0.0
    %1754 = vmatpush1.msra.mxu0 %v1438
    %1755 = vmatprep.subr.mxu0 0.0
    %1756 = vmatpush1.msra.mxu0 %v1439
    %1757 = vmatprep.subr.mxu0 0.0
    %1758 = vmatpush1.msra.mxu0 %v1440
    %1759 = vmatprep.subr.mxu0 0.0
    %1760 = vmatpush1.msra.mxu0 %v1441
    %1761 = vmatprep.subr.mxu0 0.0
    %1762 = vmatpush1.msra.mxu0 %v1442
    %1763 = vmatprep.subr.mxu0 0.0
    %1764 = vmatpush1.msra.mxu0 %v1443
    %1765 = vmatprep.subr.mxu0 0.0
    %1766 = vmatpush1.msra.mxu0 %v1444
    %1767 = vmatprep.subr.mxu0 0.0
    %1768 = vmatpush1.msra.mxu0 %v1445
    %1769 = vmatprep.subr.mxu0 0.0
    %1770 = vmatpush1.msra.mxu0 %v1446
    %1771 = vmatprep.subr.mxu0 0.0
    %1772 = vmatpush1.msra.mxu0 %v1447
    %1773 = vmatprep.subr.mxu0 0.0
    %1774 = vmatpush1.msra.mxu0 %v1448
    %1775 = vmatprep.mubr.f32.mxu0 %v87
    %1776 = vmatmul.mubr.f32.gmra.mrb[0].mxu0 %v86
    %v1777 = vpop.f32.mrb[0].mxu0
    %v1778 = vadd.f32 %v1708, %v1777
    %v1779 = vpop.f32.mrb[0].mxu0
    %1780 = vdwg.mxu0
    %1781 = vmatprep.subr.mxu0 0.0
    %1782 = vmatpush1.msra.mxu0 %v1449
    %1783 = vmatprep.subr.mxu0 0.0
    %1784 = vmatpush1.msra.mxu0 %v1450
    %1785 = vmatprep.subr.mxu0 0.0
    %1786 = vmatpush1.msra.mxu0 %v1451
    %1787 = vmatprep.subr.mxu0 0.0
    %1788 = vmatpush1.msra.mxu0 %v1452
    %1789 = vmatprep.subr.mxu0 0.0
    %1790 = vmatpush1.msra.mxu0 %v1453
    %1791 = vmatprep.subr.mxu0 0.0
    %1792 = vmatpush1.msra.mxu0 %v1454
    %1793 = vmatprep.subr.mxu0 0.0
    %1794 = vmatpush1.msra.mxu0 %v1455
    %1795 = vmatprep.subr.mxu0 0.0
    %1796 = vmatpush1.msra.mxu0 %v1456
    %1797 = vmatprep.subr.mxu0 0.0
    %1798 = vmatpush1.msra.mxu0 %v1457
    %1799 = vmatprep.subr.mxu0 0.0
    %1800 = vmatpush1.msra.mxu0 %v1458
    %1801 = vmatprep.subr.mxu0 0.0
    %1802 = vmatpush1.msra.mxu0 %v1459
    %1803 = vmatprep.subr.mxu0 0.0
    %1804 = vmatpush1.msra.mxu0 %v1460
    %1805 = vmatprep.subr.mxu0 0.0
    %1806 = vmatpush1.msra.mxu0 %v1461
    %1807 = vmatprep.subr.mxu0 0.0
    %1808 = vmatpush1.msra.mxu0 %v1462
    %1809 = vmatprep.subr.mxu0 0.0
    %1810 = vmatpush1.msra.mxu0 %v1463
    %1811 = vmatprep.subr.mxu0 0.0
    %1812 = vmatpush1.msra.mxu0 %v1464
    %1813 = vmatprep.subr.mxu0 0.0
    %1814 = vmatpush1.msra.mxu0 %v1465
    %1815 = vmatprep.subr.mxu0 0.0
    %1816 = vmatpush1.msra.mxu0 %v1466
    %1817 = vmatprep.subr.mxu0 0.0
    %1818 = vmatpush1.msra.mxu0 %v1467
    %1819 = vmatprep.subr.mxu0 0.0
    %1820 = vmatpush1.msra.mxu0 %v1468
    %1821 = vmatprep.subr.mxu0 0.0
    %1822 = vmatpush1.msra.mxu0 %v1469
    %1823 = vmatprep.subr.mxu0 0.0
    %1824 = vmatpush1.msra.mxu0 %v1470
    %1825 = vmatprep.subr.mxu0 0.0
    %1826 = vmatpush1.msra.mxu0 %v1471
    %1827 = vmatprep.subr.mxu0 0.0
    %1828 = vmatpush1.msra.mxu0 %v1472
    %1829 = vmatprep.subr.mxu0 0.0
    %1830 = vmatpush1.msra.mxu0 %v1473
    %1831 = vmatprep.subr.mxu0 0.0
    %1832 = vmatpush1.msra.mxu0 %v1474
    %1833 = vmatprep.subr.mxu0 0.0
    %1834 = vmatpush1.msra.mxu0 %v1475
    %1835 = vmatprep.subr.mxu0 0.0
    %1836 = vmatpush1.msra.mxu0 %v1476
    %1837 = vmatprep.subr.mxu0 0.0
    %1838 = vmatpush1.msra.mxu0 %v1477
    %1839 = vmatprep.subr.mxu0 0.0
    %1840 = vmatpush1.msra.mxu0 %v1478
    %1841 = vmatprep.subr.mxu0 0.0
    %1842 = vmatpush1.msra.mxu0 %v1479
    %1843 = vmatprep.subr.mxu0 0.0
    %1844 = vmatpush1.msra.mxu0 %v1480
    %1845 = vmatprep.mubr.f32.mxu0 %v89
    %1846 = vmatmul.mubr.f32.gmra.mrb[0].mxu0 %v88
    %v1847 = vpop.f32.mrb[0].mxu0
    %v1848 = vadd.f32 %v1778, %v1847
    %v1849 = vpop.f32.mrb[0].mxu0
    %1850 = vdwg.mxu0
    %1851 = vmatprep.subr.mxu0 0.0
    %1852 = vmatpush1.msra.mxu0 %v1481
    %1853 = vmatprep.subr.mxu0 0.0
    %1854 = vmatpush1.msra.mxu0 %v1482
    %1855 = vmatprep.subr.mxu0 0.0
    %1856 = vmatpush1.msra.mxu0 %v1483
    %1857 = vmatprep.subr.mxu0 0.0
    %1858 = vmatpush1.msra.mxu0 %v1484
    %1859 = vmatprep.subr.mxu0 0.0
    %1860 = vmatpush1.msra.mxu0 %v1485
    %1861 = vmatprep.subr.mxu0 0.0
    %1862 = vmatpush1.msra.mxu0 %v1486
    %1863 = vmatprep.subr.mxu0 0.0
    %1864 = vmatpush1.msra.mxu0 %v1487
    %1865 = vmatprep.subr.mxu0 0.0
    %1866 = vmatpush1.msra.mxu0 %v1488
    %1867 = vmatprep.subr.mxu0 0.0
    %1868 = vmatpush1.msra.mxu0 %v1489
    %1869 = vmatprep.subr.mxu0 0.0
    %1870 = vmatpush1.msra.mxu0 %v1490
    %1871 = vmatprep.subr.mxu0 0.0
    %1872 = vmatpush1.msra.mxu0 %v1491
    %1873 = vmatprep.subr.mxu0 0.0
    %1874 = vmatpush1.msra.mxu0 %v1492
    %1875 = vmatprep.subr.mxu0 0.0
    %1876 = vmatpush1.msra.mxu0 %v1493
    %1877 = vmatprep.subr.mxu0 0.0
    %1878 = vmatpush1.msra.mxu0 %v1494
    %1879 = vmatprep.subr.mxu0 0.0
    %1880 = vmatpush1.msra.mxu0 %v1495
    %1881 = vmatprep.subr.mxu0 0.0
    %1882 = vmatpush1.msra.mxu0 %v1496
    %1883 = vmatprep.subr.mxu0 0.0
    %1884 = vmatpush1.msra.mxu0 %v1497
    %1885 = vmatprep.subr.mxu0 0.0
    %1886 = vmatpush1.msra.mxu0 %v1498
    %1887 = vmatprep.subr.mxu0 0.0
    %1888 = vmatpush1.msra.mxu0 %v1499
    %1889 = vmatprep.subr.mxu0 0.0
    %1890 = vmatpush1.msra.mxu0 %v1500
    %1891 = vmatprep.subr.mxu0 0.0
    %1892 = vmatpush1.msra.mxu0 %v1501
    %1893 = vmatprep.subr.mxu0 0.0
    %1894 = vmatpush1.msra.mxu0 %v1502
    %1895 = vmatprep.subr.mxu0 0.0
    %1896 = vmatpush1.msra.mxu0 %v1503
    %1897 = vmatprep.subr.mxu0 0.0
    %1898 = vmatpush1.msra.mxu0 %v1504
    %1899 = vmatprep.subr.mxu0 0.0
    %1900 = vmatpush1.msra.mxu0 %v1505
    %1901 = vmatprep.subr.mxu0 0.0
    %1902 = vmatpush1.msra.mxu0 %v1506
    %1903 = vmatprep.subr.mxu0 0.0
    %1904 = vmatpush1.msra.mxu0 %v1507
    %1905 = vmatprep.subr.mxu0 0.0
    %1906 = vmatpush1.msra.mxu0 %v1508
    %1907 = vmatprep.subr.mxu0 0.0
    %1908 = vmatpush1.msra.mxu0 %v1509
    %1909 = vmatprep.subr.mxu0 0.0
    %1910 = vmatpush1.msra.mxu0 %v1510
    %1911 = vmatprep.subr.mxu0 0.0
    %1912 = vmatpush1.msra.mxu0 %v1511
    %1913 = vmatprep.subr.mxu0 0.0
    %1914 = vmatpush1.msra.mxu0 %v1512
    %1915 = vmatprep.mubr.f32.mxu0 %v91
    %1916 = vmatmul.mubr.f32.gmra.mrb[0].mxu0 %v90
    %v1917 = vpop.f32.mrb[0].mxu0
    %v1918 = vadd.f32 %v1848, %v1917
    %v1919 = vpop.f32.mrb[0].mxu0
    %1920 = vdwg.mxu0
    %1921 = vmatprep.subr.mxu0 0.0
    %1922 = vmatpush1.msra.mxu0 %v1513
    %1923 = vmatprep.subr.mxu0 0.0
    %1924 = vmatpush1.msra.mxu0 %v1514
    %1925 = vmatprep.subr.mxu0 0.0
    %1926 = vmatpush1.msra.mxu0 %v1515
    %1927 = vmatprep.subr.mxu0 0.0
    %1928 = vmatpush1.msra.mxu0 %v1516
    %1929 = vmatprep.subr.mxu0 0.0
    %1930 = vmatpush1.msra.mxu0 %v1517
    %1931 = vmatprep.subr.mxu0 0.0
    %1932 = vmatpush1.msra.mxu0 %v1518
    %1933 = vmatprep.subr.mxu0 0.0
    %1934 = vmatpush1.msra.mxu0 %v1519
    %1935 = vmatprep.subr.mxu0 0.0
    %1936 = vmatpush1.msra.mxu0 %v1520
    %1937 = vmatprep.subr.mxu0 0.0
    %1938 = vmatpush1.msra.mxu0 %v1521
    %1939 = vmatprep.subr.mxu0 0.0
    %1940 = vmatpush1.msra.mxu0 %v1522
    %1941 = vmatprep.subr.mxu0 0.0
    %1942 = vmatpush1.msra.mxu0 %v1523
    %1943 = vmatprep.subr.mxu0 0.0
    %1944 = vmatpush1.msra.mxu0 %v1524
    %1945 = vmatprep.subr.mxu0 0.0
    %1946 = vmatpush1.msra.mxu0 %v1525
    %1947 = vmatprep.subr.mxu0 0.0
    %1948 = vmatpush1.msra.mxu0 %v1526
    %1949 = vmatprep.subr.mxu0 0.0
    %1950 = vmatpush1.msra.mxu0 %v1527
    %1951 = vmatprep.subr.mxu0 0.0
    %1952 = vmatpush1.msra.mxu0 %v1528
    %1953 = vmatprep.subr.mxu0 0.0
    %1954 = vmatpush1.msra.mxu0 %v1529
    %1955 = vmatprep.subr.mxu0 0.0
    %1956 = vmatpush1.msra.mxu0 %v1530
    %1957 = vmatprep.subr.mxu0 0.0
    %1958 = vmatpush1.msra.mxu0 %v1531
    %1959 = vmatprep.subr.mxu0 0.0
    %1960 = vmatpush1.msra.mxu0 %v1532
    %1961 = vmatprep.subr.mxu0 0.0
    %1962 = vmatpush1.msra.mxu0 %v1533
    %1963 = vmatprep.subr.mxu0 0.0
    %1964 = vmatpush1.msra.mxu0 %v1534
    %1965 = vmatprep.subr.mxu0 0.0
    %1966 = vmatpush1.msra.mxu0 %v1535
    %1967 = vmatprep.subr.mxu0 0.0
    %1968 = vmatpush1.msra.mxu0 %v1536
    %1969 = vmatprep.subr.mxu0 0.0
    %1970 = vmatpush1.msra.mxu0 %v1537
    %1971 = vmatprep.subr.mxu0 0.0
    %1972 = vmatpush1.msra.mxu0 %v1538
    %1973 = vmatprep.subr.mxu0 0.0
    %1974 = vmatpush1.msra.mxu0 %v1539
    %1975 = vmatprep.subr.mxu0 0.0
    %1976 = vmatpush1.msra.mxu0 %v1540
    %1977 = vmatprep.subr.mxu0 0.0
    %1978 = vmatpush1.msra.mxu0 %v1541
    %1979 = vmatprep.subr.mxu0 0.0
    %1980 = vmatpush1.msra.mxu0 %v1542
    %1981 = vmatprep.subr.mxu0 0.0
    %1982 = vmatpush1.msra.mxu0 %v1543
    %1983 = vmatprep.subr.mxu0 0.0
    %1984 = vmatpush1.msra.mxu0 %v1544
    %1985 = vmatprep.mubr.f32.mxu0 %v93
    %1986 = vmatmul.mubr.f32.gmra.mrb[0].mxu0 %v92
    %v1987 = vpop.f32.mrb[0].mxu0
    %v1988 = vadd.f32 %v1918, %v1987
    %v1989 = vpop.f32.mrb[0].mxu0
    %1990 = vdwg.mxu0
    %1991 = vmatprep.subr.mxu0 0.0
    %1992 = vmatpush1.msra.mxu0 %v1545
    %1993 = vmatprep.subr.mxu0 0.0
    %1994 = vmatpush1.msra.mxu0 %v1546
    %1995 = vmatprep.subr.mxu0 0.0
    %1996 = vmatpush1.msra.mxu0 %v1547
    %1997 = vmatprep.subr.mxu0 0.0
    %1998 = vmatpush1.msra.mxu0 %v1548
    %1999 = vmatprep.subr.mxu0 0.0
    %2000 = vmatpush1.msra.mxu0 %v1549
    %2001 = vmatprep.subr.mxu0 0.0
    %2002 = vmatpush1.msra.mxu0 %v1550
    %2003 = vmatprep.subr.mxu0 0.0
    %2004 = vmatpush1.msra.mxu0 %v1551
    %2005 = vmatprep.subr.mxu0 0.0
    %2006 = vmatpush1.msra.mxu0 %v1552
    %2007 = vmatprep.subr.mxu0 0.0
    %2008 = vmatpush1.msra.mxu0 %v1553
    %2009 = vmatprep.subr.mxu0 0.0
    %2010 = vmatpush1.msra.mxu0 %v1554
    %2011 = vmatprep.subr.mxu0 0.0
    %2012 = vmatpush1.msra.mxu0 %v1555
    %2013 = vmatprep.subr.mxu0 0.0
    %2014 = vmatpush1.msra.mxu0 %v1556
    %2015 = vmatprep.subr.mxu0 0.0
    %2016 = vmatpush1.msra.mxu0 %v1557
    %2017 = vmatprep.subr.mxu0 0.0
    %2018 = vmatpush1.msra.mxu0 %v1558
    %2019 = vmatprep.subr.mxu0 0.0
    %2020 = vmatpush1.msra.mxu0 %v1559
    %2021 = vmatprep.subr.mxu0 0.0
    %2022 = vmatpush1.msra.mxu0 %v1560
    %2023 = vmatprep.subr.mxu0 0.0
    %2024 = vmatpush1.msra.mxu0 %v1561
    %2025 = vmatprep.subr.mxu0 0.0
    %2026 = vmatpush1.msra.mxu0 %v1562
    %2027 = vmatprep.subr.mxu0 0.0
    %2028 = vmatpush1.msra.mxu0 %v1563
    %2029 = vmatprep.subr.mxu0 0.0
    %2030 = vmatpush1.msra.mxu0 %v1564
    %2031 = vmatprep.subr.mxu0 0.0
    %2032 = vmatpush1.msra.mxu0 %v1565
    %2033 = vmatprep.subr.mxu0 0.0
    %2034 = vmatpush1.msra.mxu0 %v1566
    %2035 = vmatprep.subr.mxu0 0.0
    %2036 = vmatpush1.msra.mxu0 %v1567
    %2037 = vmatprep.subr.mxu0 0.0
    %2038 = vmatpush1.msra.mxu0 %v1568
    %2039 = vmatprep.subr.mxu0 0.0
    %2040 = vmatpush1.msra.mxu0 %v1569
    %2041 = vmatprep.subr.mxu0 0.0
    %2042 = vmatpush1.msra.mxu0 %v1570
    %2043 = vmatprep.subr.mxu0 0.0
    %2044 = vmatpush1.msra.mxu0 %v1571
    %2045 = vmatprep.subr.mxu0 0.0
    %2046 = vmatpush1.msra.mxu0 %v1572
    %2047 = vmatprep.subr.mxu0 0.0
    %2048 = vmatpush1.msra.mxu0 %v1573
    %2049 = vmatprep.subr.mxu0 0.0
    %2050 = vmatpush1.msra.mxu0 %v1574
    %2051 = vmatprep.subr.mxu0 0.0
    %2052 = vmatpush1.msra.mxu0 %v1575
    %2053 = vmatprep.subr.mxu0 0.0
    %2054 = vmatpush1.msra.mxu0 %v1576
    %2055 = vmatprep.mubr.f32.mxu0 %v95
    %2056 = vmatmul.mubr.f32.gmra.mrb[0].mxu0 %v94
    %v2057 = vpop.f32.mrb[0].mxu0
    %v2058 = vadd.f32 %v1988, %v2057
    %v2059 = vpop.f32.mrb[0].mxu0
    %2060 = vdwg.mxu0
    %2061 = vmatprep.subr.mxu0 0.0
    %2062 = vmatpush1.msra.mxu0 %v1577
    %2063 = vmatprep.subr.mxu0 0.0
    %2064 = vmatpush1.msra.mxu0 %v1578
    %2065 = vmatprep.subr.mxu0 0.0
    %2066 = vmatpush1.msra.mxu0 %v1579
    %2067 = vmatprep.subr.mxu0 0.0
    %2068 = vmatpush1.msra.mxu0 %v1580
    %2069 = vmatprep.subr.mxu0 0.0
    %2070 = vmatpush1.msra.mxu0 %v1581
    %2071 = vmatprep.subr.mxu0 0.0
    %2072 = vmatpush1.msra.mxu0 %v1582
    %2073 = vmatprep.subr.mxu0 0.0
    %2074 = vmatpush1.msra.mxu0 %v1583
    %2075 = vmatprep.subr.mxu0 0.0
    %2076 = vmatpush1.msra.mxu0 %v1584
    %2077 = vmatprep.subr.mxu0 0.0
    %2078 = vmatpush1.msra.mxu0 %v1585
    %2079 = vmatprep.subr.mxu0 0.0
    %2080 = vmatpush1.msra.mxu0 %v1586
    %2081 = vmatprep.subr.mxu0 0.0
    %2082 = vmatpush1.msra.mxu0 %v1587
    %2083 = vmatprep.subr.mxu0 0.0
    %2084 = vmatpush1.msra.mxu0 %v1588
    %2085 = vmatprep.subr.mxu0 0.0
    %2086 = vmatpush1.msra.mxu0 %v1589
    %2087 = vmatprep.subr.mxu0 0.0
    %2088 = vmatpush1.msra.mxu0 %v1590
    %2089 = vmatprep.subr.mxu0 0.0
    %2090 = vmatpush1.msra.mxu0 %v1591
    %2091 = vmatprep.subr.mxu0 0.0
    %2092 = vmatpush1.msra.mxu0 %v1592
    %2093 = vmatprep.subr.mxu0 0.0
    %2094 = vmatpush1.msra.mxu0 %v1593
    %2095 = vmatprep.subr.mxu0 0.0
    %2096 = vmatpush1.msra.mxu0 %v1594
    %2097 = vmatprep.subr.mxu0 0.0
    %2098 = vmatpush1.msra.mxu0 %v1595
    %2099 = vmatprep.subr.mxu0 0.0
    %2100 = vmatpush1.msra.mxu0 %v1596
    %2101 = vmatprep.subr.mxu0 0.0
    %2102 = vmatpush1.msra.mxu0 %v1597
    %2103 = vmatprep.subr.mxu0 0.0
    %2104 = vmatpush1.msra.mxu0 %v1598
    %2105 = vmatprep.subr.mxu0 0.0
    %2106 = vmatpush1.msra.mxu0 %v1599
    %2107 = vmatprep.subr.mxu0 0.0
    %2108 = vmatpush1.msra.mxu0 %v1600
    %2109 = vmatprep.subr.mxu0 0.0
    %2110 = vmatpush1.msra.mxu0 %v1601
    %2111 = vmatprep.subr.mxu0 0.0
    %2112 = vmatpush1.msra.mxu0 %v1602
    %2113 = vmatprep.subr.mxu0 0.0
    %2114 = vmatpush1.msra.mxu0 %v1603
    %2115 = vmatprep.subr.mxu0 0.0
    %2116 = vmatpush1.msra.mxu0 %v1604
    %2117 = vmatprep.subr.mxu0 0.0
    %2118 = vmatpush1.msra.mxu0 %v1605
    %2119 = vmatprep.subr.mxu0 0.0
    %2120 = vmatpush1.msra.mxu0 %v1606
    %2121 = vmatprep.subr.mxu0 0.0
    %2122 = vmatpush1.msra.mxu0 %v1607
    %2123 = vmatprep.subr.mxu0 0.0
    %2124 = vmatpush1.msra.mxu0 %v1608
    %2125 = vmatprep.mubr.f32.mxu0 %v97
    %2126 = vmatmul.mubr.f32.gmra.mrb[0].mxu0 %v96
    %v2127 = vpop.f32.mrb[0].mxu0
    %v2128 = vadd.f32 %v2058, %v2127
    %v2129 = vpop.f32.mrb[0].mxu0
    %2130 = vdwg.mxu0
    %2131 = vmatprep.subr.mxu0 0.0
    %2132 = vmatpush1.msra.mxu0 %v1609
    %2133 = vmatprep.subr.mxu0 0.0
    %2134 = vmatpush1.msra.mxu0 %v1610
    %2135 = vmatprep.subr.mxu0 0.0
    %2136 = vmatpush1.msra.mxu0 %v1611
    %2137 = vmatprep.subr.mxu0 0.0
    %2138 = vmatpush1.msra.mxu0 %v1612
    %2139 = vmatprep.subr.mxu0 0.0
    %2140 = vmatpush1.msra.mxu0 %v1613
    %2141 = vmatprep.subr.mxu0 0.0
    %2142 = vmatpush1.msra.mxu0 %v1614
    %2143 = vmatprep.subr.mxu0 0.0
    %2144 = vmatpush1.msra.mxu0 %v1615
    %2145 = vmatprep.subr.mxu0 0.0
    %2146 = vmatpush1.msra.mxu0 %v1616
    %2147 = vmatprep.subr.mxu0 0.0
    %2148 = vmatpush1.msra.mxu0 %v1617
    %2149 = vmatprep.subr.mxu0 0.0
    %2150 = vmatpush1.msra.mxu0 %v1618
    %2151 = vmatprep.subr.mxu0 0.0
    %2152 = vmatpush1.msra.mxu0 %v1619
    %2153 = vmatprep.subr.mxu0 0.0
    %2154 = vmatpush1.msra.mxu0 %v1620
    %2155 = vmatprep.subr.mxu0 0.0
    %2156 = vmatpush1.msra.mxu0 %v1621
    %2157 = vmatprep.subr.mxu0 0.0
    %2158 = vmatpush1.msra.mxu0 %v1622
    %2159 = vmatprep.subr.mxu0 0.0
    %2160 = vmatpush1.msra.mxu0 %v1623
    %2161 = vmatprep.subr.mxu0 0.0
    %2162 = vmatpush1.msra.mxu0 %v1624
    %2163 = vmatprep.subr.mxu0 0.0
    %2164 = vmatpush1.msra.mxu0 %v1625
    %2165 = vmatprep.subr.mxu0 0.0
    %2166 = vmatpush1.msra.mxu0 %v1626
    %2167 = vmatprep.subr.mxu0 0.0
    %2168 = vmatpush1.msra.mxu0 %v1627
    %2169 = vmatprep.subr.mxu0 0.0
    %2170 = vmatpush1.msra.mxu0 %v1628
    %2171 = vmatprep.subr.mxu0 0.0
    %2172 = vmatpush1.msra.mxu0 %v1629
    %2173 = vmatprep.subr.mxu0 0.0
    %2174 = vmatpush1.msra.mxu0 %v1630
    %2175 = vmatprep.subr.mxu0 0.0
    %2176 = vmatpush1.msra.mxu0 %v1631
    %2177 = vmatprep.subr.mxu0 0.0
    %2178 = vmatpush1.msra.mxu0 %v1632
    %2179 = vmatprep.subr.mxu0 0.0
    %2180 = vmatpush1.msra.mxu0 %v1633
    %2181 = vmatprep.subr.mxu0 0.0
    %2182 = vmatpush1.msra.mxu0 %v1634
    %2183 = vmatprep.subr.mxu0 0.0
    %2184 = vmatpush1.msra.mxu0 %v1635
    %2185 = vmatprep.subr.mxu0 0.0
    %2186 = vmatpush1.msra.mxu0 %v1636
    %2187 = vmatprep.subr.mxu0 0.0
    %2188 = vmatpush1.msra.mxu0 %v1637
    %2189 = vmatprep.subr.mxu0 0.0
    %2190 = vmatpush1.msra.mxu0 %v1638
    %2191 = vmatprep.subr.mxu0 0.0
    %2192 = vmatpush1.msra.mxu0 %v1639
    %2193 = vmatprep.subr.mxu0 0.0
    %2194 = vmatpush1.msra.mxu0 %v1640
    %2195 = vmatprep.mubr.f32.mxu0 %v99
    %2196 = vmatmul.mubr.f32.gmra.mrb[0].mxu0 %v98
    %v2197 = vpop.f32.mrb[0].mxu0
    %v2198 = vadd.f32 %v2128, %v2197
    %v2199 = vpop.f32.mrb[0].mxu0
    %2200 = vdwg.mxu0
    %v2201 = vstv %s32
    %v2202 = vmul.f32 %v2201, %v2198
    %2203 = vst [vmem:[#allocation7] sm:$0xff] %v2202
    // Predicated region
    $region18: #{tpu_custom_call.1} parent=1 // pred_check
      _
    $region19: #{tpu_custom_call.1} parent=1 // pred_check_branch
      %2205 = sbr.rel (0) target = $region21
    $region20: #{tpu_custom_call.1} parent=1 // pred_region
      %s2207 = ssub.s32 128, 128
      %2208 = vsyncadd [#allocation6], %s2207
      %s2210 = sshll.u32 [#allocation7], 4
      %s2211 = int_to_ptr.vmem [resolvable:$true] %s2210
      %2213 = dma.vmem_to_hbm [thread:$0]  %s2211, 128, %s3, [#allocation6]
    $region21: #{tpu_custom_call.1} parent=1 // pred_fallthru
      _
    // Predicated region
    $region22: #{tpu_custom_call.1} parent=1 // pred_check
      _
    $region23: #{tpu_custom_call.1} parent=1 // pred_check_branch
      %2215 = sbr.rel (0) target = $region25
    $region24: #{tpu_custom_call.1} parent=1 // pred_region
      %s2217 = ssub.s32 2048, 2048
      %2218 = vsyncadd [#allocation9], %s2217
      %s2220 = sshll.u32 [#allocation8], 4
      %s2221 = int_to_ptr.vmem [resolvable:$true] %s2220
      %2223 = dma.vmem_to_hbm [thread:$0]  %s2221, 2048, %s4, [#allocation9]
    $region25: #{tpu_custom_call.1} parent=1 // pred_fallthru
      _
    // Predicated region
    $region26: #{tpu_custom_call.1} parent=1 // pred_check
      _
    $region27: #{tpu_custom_call.1} parent=1 // pred_check_branch
      %2225 = sbr.rel (0) target = $region29
    $region28: #{tpu_custom_call.1} parent=1 // pred_region
      %2226 = dma.done [#allocation6], 128
    $region29: #{tpu_custom_call.1} parent=1 // pred_fallthru
      _
    // Predicated region
    $region30: #{tpu_custom_call.1} parent=1 // pred_check
      _
    $region31: #{tpu_custom_call.1} parent=1 // pred_check_branch
      %2228 = sbr.rel (0) target = $region33
    $region32: #{tpu_custom_call.1} parent=1 // pred_region
      %2229 = dma.done [#allocation9], 2048
    $region33: #{tpu_custom_call.1} parent=1 // pred_fallthru
      _
    %2230 = vsyncpa [#allocation5], 1
    %2231 = vsyncpa [#allocation6], 1
    %2232 = vsyncpa [#allocation9], 1

</llo_original>
